<compile_context>
chip_gen: v7x
topology: tpu7x:2x2x1
jax: 0.10.0
libtpu: 0.0.40
codegen_flags: <defaults>
</compile_context>

<pallas_src>
import numpy as np
import jax
import jax.numpy as jnp
from jax import lax
from jax.experimental import pallas as pl
from jax.experimental.pallas import tpu as pltpu


def _round_up(x, m):
    return ((x + m - 1) // m) * m


# ----------------------------- Fused Pallas kernel ---------------------------

def _fused_forward_kernel(x_ref, sel_ref, decay_ref,
                          wg_ref, bg_ref,
                          wx_ref, wh_ref, bgate_ref,
                          wd_ref, bd_ref,
                          w1_ref, b1_ref, w2_ref, b2_ref,
                          o_ref):
    T = x_ref.shape[0]
    U_pad = sel_ref.shape[1]
    H = wd_ref.shape[0]

    # Load weights / biases once; broadcasts hoisted out of the recurrence.
    wg = wg_ref[...]          # (F, C)
    bg = bg_ref[...]          # (1, C)
    wx = wx_ref[...]          # (C, 4H)  lane-dense gate weights, input path
    wh = wh_ref[...]          # (H, 4H)  lane-dense gate weights, hidden path
    bgate = bgate_ref[...]    # (1, 4H)  merged gate bias
    wd = wd_ref[...]          # (H, H)
    bd = bd_ref[...]          # (1, H)

    def step(t, carry):
        h, c = carry

        # --- GNN stand-in (Linear + ReLU) on this graph's padded user nodes --
        emb = jnp.dot(x_ref[t], wg, preferred_element_type=jnp.float32) + bg
        emb = jnp.maximum(emb, 0.0)                                    # (N_pad, C)

        # --- alignment: one-hot select local nodes into global-user slots ----
        # Absent users have an all-zero sel row -> zero embedding, matching the
        # reference's zero-initialised aligned_embeddings; padded GNN rows are
        # never selected.
        x_t = jnp.dot(sel_ref[t], emb, preferred_element_type=jnp.float32)  # (U_pad, C)

        # --- Time-LSTM cell (bounded time decay of short-term cell memory) ----
        d = decay_ref[t]                         # scalar in (0, 1], from SMEM
        c_s = jnp.tanh(jnp.dot(c, wd, preferred_element_type=jnp.float32) + bd)
        c_adj = (c - c_s) + c_s * d

        # One lane-dense gate block: (U_pad, 4H) = x_t @ (C,4H) + h @ (H,4H) + b
        z = (jnp.dot(x_t, wx, preferred_element_type=jnp.float32)
             + jnp.dot(h, wh, preferred_element_type=jnp.float32)
             + bgate)
        f = jax.nn.sigmoid(z[:, 0 * H:1 * H])
        i = jax.nn.sigmoid(z[:, 1 * H:2 * H])
        o = jax.nn.sigmoid(z[:, 2 * H:3 * H])
        g = jnp.tanh(z[:, 3 * H:4 * H])

        c_new = f * c_adj + i * g
        h_new = o * jnp.tanh(c_new)
        return h_new, c_new

    h0 = jnp.zeros((U_pad, H), jnp.float32)
    c0 = jnp.zeros((U_pad, H), jnp.float32)
    h_final, _ = lax.fori_loop(0, T, step, (h0, c0), unroll=True)

    # --- classifier: Linear(H, H//2) -> ReLU -> Linear(H//2, 4-in-128-lanes) --
    # Runs exactly once, after the recurrence; lane-dense 128-wide store.
    y1 = jnp.dot(h_final, w1_ref[...], preferred_element_type=jnp.float32) + b1_ref[...]
    y1 = jnp.maximum(y1, 0.0)
    o_ref[...] = (jnp.dot(y1, w2_ref[...], preferred_element_type=jnp.float32)
                  + b2_ref[...])


def fused_forward(x_stack, sel, decay, w_gnn, b_gnn, wx_cat, wh_cat, b_gate,
                  wd, bd, w1, b1, w2p, b2p):
    U_pad = sel.shape[1]
    OUT = w2p.shape[1]
    vmem = pl.BlockSpec(memory_space=pltpu.MemorySpace.VMEM)
    smem = pl.BlockSpec(memory_space=pltpu.MemorySpace.SMEM)
    return pl.pallas_call(
        _fused_forward_kernel,
        out_shape=jax.ShapeDtypeStruct((U_pad, OUT), jnp.float32),
        in_specs=[vmem, vmem, smem,            # x_stack, sel, decay
                  vmem, vmem,                  # w_gnn, b_gnn
                  vmem, vmem, vmem,            # wx_cat, wh_cat, b_gate
                  vmem, vmem,                  # wd, bd
                  vmem, vmem, vmem, vmem],     # w1, b1, w2p, b2p
        out_specs=vmem,
    )(x_stack, sel, decay, w_gnn, b_gnn, wx_cat, wh_cat, b_gate,
      wd, bd, w1, b1, w2p, b2p)


# ----------------------------- Model wrapper ---------------------------------

class CombinedModelPallas:
    NUM_CLASSES = 4

    def __init__(self, hidden_size, hidden_channels, in_feat, key):
        H, C, F = hidden_size, hidden_channels, in_feat
        H2 = H // 2
        self.H, self.C, self.F, self.H2 = H, C, F, H2
        ks = jax.random.split(key, 6)
        s = 0.1
        # GnnModel stand-in (Linear(in_feat, hidden_channels) + ReLU)
        self.w_gnn = s * jax.random.normal(ks[0], (F, C), jnp.float32)
        self.b_gnn = jnp.zeros((1, C), jnp.float32)
        # TimeLSTM(hidden_channels -> hidden_size); gates (f, i, o, g) are
        # concatenated along the output axis so one lane-dense (., 4H) dot per
        # operand computes all four gates.
        self.wx_cat = s * jax.random.normal(ks[1], (C, 4 * H), jnp.float32)
        self.wh_cat = s * jax.random.normal(ks[2], (H, 4 * H), jnp.float32)
        self.b_gate = jnp.zeros((1, 4 * H), jnp.float32)   # bx + bh merged
        self.wd = s * jax.random.normal(ks[3], (H, H), jnp.float32)
        self.bd = jnp.zeros((1, H), jnp.float32)
        # classifier: Linear(H, H//2) -> ReLU -> Linear(H//2, 4)
        self.w1 = s * jax.random.normal(ks[4], (H, H2), jnp.float32)
        self.b1 = jnp.zeros((1, H2), jnp.float32)
        w2 = s * jax.random.normal(ks[5], (H2, self.NUM_CLASSES), jnp.float32)
        b2 = jnp.zeros((1, self.NUM_CLASSES), jnp.float32)
        # lane-dense padded head: real logits live in lanes [0:4]
        self.w2p = jnp.zeros((H2, 128), jnp.float32).at[:, :self.NUM_CLASSES].set(w2)
        self.b2p = jnp.zeros((1, 128), jnp.float32).at[:, :self.NUM_CLASSES].set(b2)

    def forward(self, time_intervals, batched_graphs, ip_mapping):
        if len(time_intervals) != len(batched_graphs):
            raise ValueError("time_intervals length %d != batched_graphs %d"
                             % (len(time_intervals), len(batched_graphs)))
        T = len(batched_graphs)

        # ---- host-side index-table construction (python dicts -> arrays) ----
        all_ips = set(ip for mapping in ip_mapping for ip in mapping)
        global_ip_list = sorted(all_ips)
        gmap = {ip: idx for idx, ip in enumerate(global_ip_list)}
        U = len(global_ip_list)
        U_pad = _round_up(max(U, 1), 8)
        n_max = max(g["user_x"].shape[0] for g in batched_graphs)
        N_pad = _round_up(max(n_max, 1), 8)

        x_stack = np.zeros((T, N_pad, self.F), np.float32)
        sel = np.zeros((T, U_pad, N_pad), np.float32)        # one-hot alignment
        for t, (g, mapping) in enumerate(zip(batched_graphs, ip_mapping)):
            ux = np.asarray(g["user_x"], np.float32)
            x_stack[t, :ux.shape[0], :] = ux
            for ip, local_idx in mapping.items():
                sel[t, gmap[ip], local_idx] = 1.0
        # Bounded T-LSTM time discount in (0, 1]; precomputed per step (scalar
        # host work, keeps transcendental off the kernel's scalar path).
        dt = np.asarray(time_intervals, np.float32)
        decay = (1.0 / np.log(np.e + dt)).astype(np.float32)

        # ---- single fused Pallas kernel: GNN -> align -> TimeLSTM -> head ----
        out = fused_forward(jnp.asarray(x_stack), jnp.asarray(sel),
                            jnp.asarray(decay),
                            self.w_gnn, self.b_gnn,
                            self.wx_cat, self.wh_cat, self.b_gate,
                            self.wd, self.bd,
                            self.w1, self.b1, self.w2p, self.b2p)
        user_logits = out[:U, :self.NUM_CLASSES]
        return user_logits, global_ip_list


# --------------------------------- Driver -------------------------------------

if __name__ == "__main__":
    in_feat = 16
    hidden_channels = 32
    hidden_size = 32

    key = jax.random.PRNGKey(0)
    ip_pool = ["10.0.0.%d" % k for k in range(8)]
    graph_ip_idx = [[0, 1, 2, 3, 4],
                    [2, 3, 4, 5, 6, 7],
                    [0, 3, 5, 6],
                    [1, 2, 3, 4, 5, 6, 7]]
    ip_mapping = [{ip_pool[g]: j for j, g in enumerate(s)} for s in graph_ip_idx]

    keys = jax.random.split(key, len(graph_ip_idx) + 1)
    # "HeteroData" stand-in: dict with the 'user' node feature matrix.
    batched_graphs = [
        {"user_x": 0.5 * jax.random.normal(keys[i], (len(s), in_feat), jnp.float32)}
        for i, s in enumerate(graph_ip_idx)
    ]
    time_intervals = [1.0, 0.5, 2.0, 1.5]

    model = CombinedModelPallas(hidden_size, hidden_channels, in_feat, keys[-1])
    logits, global_ips = model.forward(time_intervals, batched_graphs, ip_mapping)
    logits = jax.block_until_ready(logits)

    assert logits.shape == (len(global_ips), 4)
    assert bool(jnp.all(jnp.isfinite(logits)))
    print("KERNEL_OK")
</pallas_src>

<mosaic_0001>
module attributes {stable_mosaic.version = 11 : i64} {
  func.func @_fused_forward_kernel(%arg0: memref<4x8x16xf32, #tpu.memory_space<vmem>>, %arg1: memref<4x8x8xf32, #tpu.memory_space<vmem>>, %arg2: memref<4xf32, #tpu.memory_space<smem>>, %arg3: memref<16x32xf32, #tpu.memory_space<vmem>>, %arg4: memref<1x32xf32, #tpu.memory_space<vmem>>, %arg5: memref<32x128xf32, #tpu.memory_space<vmem>>, %arg6: memref<32x128xf32, #tpu.memory_space<vmem>>, %arg7: memref<1x128xf32, #tpu.memory_space<vmem>>, %arg8: memref<32x32xf32, #tpu.memory_space<vmem>>, %arg9: memref<1x32xf32, #tpu.memory_space<vmem>>, %arg10: memref<32x16xf32, #tpu.memory_space<vmem>>, %arg11: memref<1x16xf32, #tpu.memory_space<vmem>>, %arg12: memref<16x128xf32, #tpu.memory_space<vmem>>, %arg13: memref<1x128xf32, #tpu.memory_space<vmem>>, %arg14: memref<8x128xf32, #tpu.memory_space<vmem>>) attributes {dimension_semantics = [], scalar_prefetch = 0 : i64, scratch_operands = 0 : i64, tpu.core_type = #tpu.core_type<tc>} {
    %c0 = arith.constant 0 : index
    %c0_0 = arith.constant 0 : index
    %0 = vector.load %arg3[%c0, %c0_0] : memref<16x32xf32, #tpu.memory_space<vmem>>, vector<16x32xf32>
    %c0_1 = arith.constant 0 : index
    %c0_2 = arith.constant 0 : index
    %1 = vector.load %arg4[%c0_1, %c0_2] : memref<1x32xf32, #tpu.memory_space<vmem>>, vector<1x32xf32>
    %c0_3 = arith.constant 0 : index
    %c0_4 = arith.constant 0 : index
    %2 = vector.load %arg5[%c0_3, %c0_4] : memref<32x128xf32, #tpu.memory_space<vmem>>, vector<32x128xf32>
    %c0_5 = arith.constant 0 : index
    %c0_6 = arith.constant 0 : index
    %3 = vector.load %arg6[%c0_5, %c0_6] : memref<32x128xf32, #tpu.memory_space<vmem>>, vector<32x128xf32>
    %c0_7 = arith.constant 0 : index
    %c0_8 = arith.constant 0 : index
    %4 = vector.load %arg7[%c0_7, %c0_8] : memref<1x128xf32, #tpu.memory_space<vmem>>, vector<1x128xf32>
    %c0_9 = arith.constant 0 : index
    %c0_10 = arith.constant 0 : index
    %5 = vector.load %arg8[%c0_9, %c0_10] : memref<32x32xf32, #tpu.memory_space<vmem>>, vector<32x32xf32>
    %c0_11 = arith.constant 0 : index
    %c0_12 = arith.constant 0 : index
    %6 = vector.load %arg9[%c0_11, %c0_12] : memref<1x32xf32, #tpu.memory_space<vmem>>, vector<1x32xf32>
    %cst = arith.constant 0.000000e+00 : f32
    %7 = vector.broadcast %cst : f32 to vector<8x32xf32>
    %cst_13 = arith.constant 0.000000e+00 : f32
    %8 = vector.broadcast %cst_13 : f32 to vector<8x32xf32>
    %c0_i32 = arith.constant 0 : i32
    %9 = arith.index_cast %c0_i32 : i32 to index
    %c0_14 = arith.constant 0 : index
    %c0_15 = arith.constant 0 : index
    %10 = vector.load %arg0[%9, %c0_14, %c0_15] : memref<4x8x16xf32, #tpu.memory_space<vmem>>, vector<1x8x16xf32>
    %11 = vector.shape_cast %10 : vector<1x8x16xf32> to vector<8x16xf32>
    %cst_16 = arith.constant dense<0.000000e+00> : vector<8x32xf32>
    %12 = tpu.matmul %11, %0, %cst_16 {dimension_numbers = #tpu.dot_dimension_numbers<[1], [0], [0], [1], [0, 0, 1, 1], [], []>} : vector<8x16xf32>, vector<16x32xf32>, vector<8x32xf32> -> vector<8x32xf32>
    %13 = vector.broadcast %1 : vector<1x32xf32> to vector<8x32xf32>
    %14 = arith.addf %12, %13 : vector<8x32xf32>
    %cst_17 = arith.constant 0.000000e+00 : f32
    %15 = vector.broadcast %cst_17 : f32 to vector<8x32xf32>
    %16 = arith.maximumf %14, %15 : vector<8x32xf32>
    %17 = arith.index_cast %c0_i32 : i32 to index
    %c0_18 = arith.constant 0 : index
    %c0_19 = arith.constant 0 : index
    %18 = vector.load %arg1[%17, %c0_18, %c0_19] : memref<4x8x8xf32, #tpu.memory_space<vmem>>, vector<1x8x8xf32>
    %19 = vector.shape_cast %18 : vector<1x8x8xf32> to vector<8x8xf32>
    %cst_20 = arith.constant dense<0.000000e+00> : vector<8x32xf32>
    %20 = tpu.matmul %19, %16, %cst_20 {dimension_numbers = #tpu.dot_dimension_numbers<[1], [0], [0], [1], [0, 0, 1, 1], [], []>} : vector<8x8xf32>, vector<8x32xf32>, vector<8x32xf32> -> vector<8x32xf32>
    %21 = arith.index_cast %c0_i32 : i32 to index
    %22 = memref.load %arg2[%21] : memref<4xf32, #tpu.memory_space<smem>>
    %cst_21 = arith.constant dense<0.000000e+00> : vector<8x32xf32>
    %23 = tpu.matmul %8, %5, %cst_21 {dimension_numbers = #tpu.dot_dimension_numbers<[1], [0], [0], [1], [0, 0, 1, 1], [], []>} : vector<8x32xf32>, vector<32x32xf32>, vector<8x32xf32> -> vector<8x32xf32>
    %24 = vector.broadcast %6 : vector<1x32xf32> to vector<8x32xf32>
    %25 = arith.addf %23, %24 : vector<8x32xf32>
    %26 = math.tanh %25 : vector<8x32xf32>
    %27 = arith.subf %8, %26 : vector<8x32xf32>
    %28 = vector.broadcast %22 : f32 to vector<8x32xf32>
    %29 = arith.mulf %26, %28 : vector<8x32xf32>
    %30 = arith.addf %27, %29 : vector<8x32xf32>
    %cst_22 = arith.constant dense<0.000000e+00> : vector<8x128xf32>
    %31 = tpu.matmul %20, %2, %cst_22 {dimension_numbers = #tpu.dot_dimension_numbers<[1], [0], [0], [1], [0, 0, 1, 1], [], []>} : vector<8x32xf32>, vector<32x128xf32>, vector<8x128xf32> -> vector<8x128xf32>
    %cst_23 = arith.constant dense<0.000000e+00> : vector<8x128xf32>
    %32 = tpu.matmul %7, %3, %cst_23 {dimension_numbers = #tpu.dot_dimension_numbers<[1], [0], [0], [1], [0, 0, 1, 1], [], []>} : vector<8x32xf32>, vector<32x128xf32>, vector<8x128xf32> -> vector<8x128xf32>
    %33 = arith.addf %31, %32 : vector<8x128xf32>
    %34 = vector.broadcast %4 : vector<1x128xf32> to vector<8x128xf32>
    %35 = arith.addf %33, %34 : vector<8x128xf32>
    %36 = vector.extract_strided_slice %35 {offsets = [0, 0], sizes = [8, 32], strides = [1, 1]} : vector<8x128xf32> to vector<8x32xf32>
    %37 = arith.negf %36 : vector<8x32xf32>
    %38 = math.exp %37 : vector<8x32xf32>
    %cst_24 = arith.constant 1.000000e+00 : f32
    %39 = vector.broadcast %cst_24 : f32 to vector<8x32xf32>
    %40 = arith.addf %39, %38 : vector<8x32xf32>
    %41 = arith.divf %39, %40 : vector<8x32xf32>
    %42 = vector.extract_strided_slice %35 {offsets = [0, 32], sizes = [8, 32], strides = [1, 1]} : vector<8x128xf32> to vector<8x32xf32>
    %43 = arith.negf %42 : vector<8x32xf32>
    %44 = math.exp %43 : vector<8x32xf32>
    %cst_25 = arith.constant 1.000000e+00 : f32
    %45 = vector.broadcast %cst_25 : f32 to vector<8x32xf32>
    %46 = arith.addf %45, %44 : vector<8x32xf32>
    %47 = arith.divf %45, %46 : vector<8x32xf32>
    %48 = vector.extract_strided_slice %35 {offsets = [0, 64], sizes = [8, 32], strides = [1, 1]} : vector<8x128xf32> to vector<8x32xf32>
    %49 = arith.negf %48 : vector<8x32xf32>
    %50 = math.exp %49 : vector<8x32xf32>
    %cst_26 = arith.constant 1.000000e+00 : f32
    %51 = vector.broadcast %cst_26 : f32 to vector<8x32xf32>
    %52 = arith.addf %51, %50 : vector<8x32xf32>
    %53 = arith.divf %51, %52 : vector<8x32xf32>
    %54 = vector.extract_strided_slice %35 {offsets = [0, 96], sizes = [8, 32], strides = [1, 1]} : vector<8x128xf32> to vector<8x32xf32>
    %55 = math.tanh %54 : vector<8x32xf32>
    %56 = arith.mulf %41, %30 : vector<8x32xf32>
    %57 = arith.mulf %47, %55 : vector<8x32xf32>
    %58 = arith.addf %56, %57 : vector<8x32xf32>
    %59 = math.tanh %58 : vector<8x32xf32>
    %60 = arith.mulf %53, %59 : vector<8x32xf32>
    %c1_i32 = arith.constant 1 : i32
    %61 = arith.index_cast %c1_i32 : i32 to index
    %c0_27 = arith.constant 0 : index
    %c0_28 = arith.constant 0 : index
    %62 = vector.load %arg0[%61, %c0_27, %c0_28] : memref<4x8x16xf32, #tpu.memory_space<vmem>>, vector<1x8x16xf32>
    %63 = vector.shape_cast %62 : vector<1x8x16xf32> to vector<8x16xf32>
    %cst_29 = arith.constant dense<0.000000e+00> : vector<8x32xf32>
    %64 = tpu.matmul %63, %0, %cst_29 {dimension_numbers = #tpu.dot_dimension_numbers<[1], [0], [0], [1], [0, 0, 1, 1], [], []>} : vector<8x16xf32>, vector<16x32xf32>, vector<8x32xf32> -> vector<8x32xf32>
    %65 = vector.broadcast %1 : vector<1x32xf32> to vector<8x32xf32>
    %66 = arith.addf %64, %65 : vector<8x32xf32>
    %cst_30 = arith.constant 0.000000e+00 : f32
    %67 = vector.broadcast %cst_30 : f32 to vector<8x32xf32>
    %68 = arith.maximumf %66, %67 : vector<8x32xf32>
    %69 = arith.index_cast %c1_i32 : i32 to index
    %c0_31 = arith.constant 0 : index
    %c0_32 = arith.constant 0 : index
    %70 = vector.load %arg1[%69, %c0_31, %c0_32] : memref<4x8x8xf32, #tpu.memory_space<vmem>>, vector<1x8x8xf32>
    %71 = vector.shape_cast %70 : vector<1x8x8xf32> to vector<8x8xf32>
    %cst_33 = arith.constant dense<0.000000e+00> : vector<8x32xf32>
    %72 = tpu.matmul %71, %68, %cst_33 {dimension_numbers = #tpu.dot_dimension_numbers<[1], [0], [0], [1], [0, 0, 1, 1], [], []>} : vector<8x8xf32>, vector<8x32xf32>, vector<8x32xf32> -> vector<8x32xf32>
    %73 = arith.index_cast %c1_i32 : i32 to index
    %74 = memref.load %arg2[%73] : memref<4xf32, #tpu.memory_space<smem>>
    %cst_34 = arith.constant dense<0.000000e+00> : vector<8x32xf32>
    %75 = tpu.matmul %58, %5, %cst_34 {dimension_numbers = #tpu.dot_dimension_numbers<[1], [0], [0], [1], [0, 0, 1, 1], [], []>} : vector<8x32xf32>, vector<32x32xf32>, vector<8x32xf32> -> vector<8x32xf32>
    %76 = vector.broadcast %6 : vector<1x32xf32> to vector<8x32xf32>
    %77 = arith.addf %75, %76 : vector<8x32xf32>
    %78 = math.tanh %77 : vector<8x32xf32>
    %79 = arith.subf %58, %78 : vector<8x32xf32>
    %80 = vector.broadcast %74 : f32 to vector<8x32xf32>
    %81 = arith.mulf %78, %80 : vector<8x32xf32>
    %82 = arith.addf %79, %81 : vector<8x32xf32>
    %cst_35 = arith.constant dense<0.000000e+00> : vector<8x128xf32>
    %83 = tpu.matmul %72, %2, %cst_35 {dimension_numbers = #tpu.dot_dimension_numbers<[1], [0], [0], [1], [0, 0, 1, 1], [], []>} : vector<8x32xf32>, vector<32x128xf32>, vector<8x128xf32> -> vector<8x128xf32>
    %cst_36 = arith.constant dense<0.000000e+00> : vector<8x128xf32>
    %84 = tpu.matmul %60, %3, %cst_36 {dimension_numbers = #tpu.dot_dimension_numbers<[1], [0], [0], [1], [0, 0, 1, 1], [], []>} : vector<8x32xf32>, vector<32x128xf32>, vector<8x128xf32> -> vector<8x128xf32>
    %85 = arith.addf %83, %84 : vector<8x128xf32>
    %86 = vector.broadcast %4 : vector<1x128xf32> to vector<8x128xf32>
    %87 = arith.addf %85, %86 : vector<8x128xf32>
    %88 = vector.extract_strided_slice %87 {offsets = [0, 0], sizes = [8, 32], strides = [1, 1]} : vector<8x128xf32> to vector<8x32xf32>
    %89 = arith.negf %88 : vector<8x32xf32>
    %90 = math.exp %89 : vector<8x32xf32>
    %cst_37 = arith.constant 1.000000e+00 : f32
    %91 = vector.broadcast %cst_37 : f32 to vector<8x32xf32>
    %92 = arith.addf %91, %90 : vector<8x32xf32>
    %93 = arith.divf %91, %92 : vector<8x32xf32>
    %94 = vector.extract_strided_slice %87 {offsets = [0, 32], sizes = [8, 32], strides = [1, 1]} : vector<8x128xf32> to vector<8x32xf32>
    %95 = arith.negf %94 : vector<8x32xf32>
    %96 = math.exp %95 : vector<8x32xf32>
    %cst_38 = arith.constant 1.000000e+00 : f32
    %97 = vector.broadcast %cst_38 : f32 to vector<8x32xf32>
    %98 = arith.addf %97, %96 : vector<8x32xf32>
    %99 = arith.divf %97, %98 : vector<8x32xf32>
    %100 = vector.extract_strided_slice %87 {offsets = [0, 64], sizes = [8, 32], strides = [1, 1]} : vector<8x128xf32> to vector<8x32xf32>
    %101 = arith.negf %100 : vector<8x32xf32>
    %102 = math.exp %101 : vector<8x32xf32>
    %cst_39 = arith.constant 1.000000e+00 : f32
    %103 = vector.broadcast %cst_39 : f32 to vector<8x32xf32>
    %104 = arith.addf %103, %102 : vector<8x32xf32>
    %105 = arith.divf %103, %104 : vector<8x32xf32>
    %106 = vector.extract_strided_slice %87 {offsets = [0, 96], sizes = [8, 32], strides = [1, 1]} : vector<8x128xf32> to vector<8x32xf32>
    %107 = math.tanh %106 : vector<8x32xf32>
    %108 = arith.mulf %93, %82 : vector<8x32xf32>
    %109 = arith.mulf %99, %107 : vector<8x32xf32>
    %110 = arith.addf %108, %109 : vector<8x32xf32>
    %111 = math.tanh %110 : vector<8x32xf32>
    %112 = arith.mulf %105, %111 : vector<8x32xf32>
    %c2_i32 = arith.constant 2 : i32
    %113 = arith.index_cast %c2_i32 : i32 to index
    %c0_40 = arith.constant 0 : index
    %c0_41 = arith.constant 0 : index
    %114 = vector.load %arg0[%113, %c0_40, %c0_41] : memref<4x8x16xf32, #tpu.memory_space<vmem>>, vector<1x8x16xf32>
    %115 = vector.shape_cast %114 : vector<1x8x16xf32> to vector<8x16xf32>
    %cst_42 = arith.constant dense<0.000000e+00> : vector<8x32xf32>
    %116 = tpu.matmul %115, %0, %cst_42 {dimension_numbers = #tpu.dot_dimension_numbers<[1], [0], [0], [1], [0, 0, 1, 1], [], []>} : vector<8x16xf32>, vector<16x32xf32>, vector<8x32xf32> -> vector<8x32xf32>
    %117 = vector.broadcast %1 : vector<1x32xf32> to vector<8x32xf32>
    %118 = arith.addf %116, %117 : vector<8x32xf32>
    %cst_43 = arith.constant 0.000000e+00 : f32
    %119 = vector.broadcast %cst_43 : f32 to vector<8x32xf32>
    %120 = arith.maximumf %118, %119 : vector<8x32xf32>
    %121 = arith.index_cast %c2_i32 : i32 to index
    %c0_44 = arith.constant 0 : index
    %c0_45 = arith.constant 0 : index
    %122 = vector.load %arg1[%121, %c0_44, %c0_45] : memref<4x8x8xf32, #tpu.memory_space<vmem>>, vector<1x8x8xf32>
    %123 = vector.shape_cast %122 : vector<1x8x8xf32> to vector<8x8xf32>
    %cst_46 = arith.constant dense<0.000000e+00> : vector<8x32xf32>
    %124 = tpu.matmul %123, %120, %cst_46 {dimension_numbers = #tpu.dot_dimension_numbers<[1], [0], [0], [1], [0, 0, 1, 1], [], []>} : vector<8x8xf32>, vector<8x32xf32>, vector<8x32xf32> -> vector<8x32xf32>
    %125 = arith.index_cast %c2_i32 : i32 to index
    %126 = memref.load %arg2[%125] : memref<4xf32, #tpu.memory_space<smem>>
    %cst_47 = arith.constant dense<0.000000e+00> : vector<8x32xf32>
    %127 = tpu.matmul %110, %5, %cst_47 {dimension_numbers = #tpu.dot_dimension_numbers<[1], [0], [0], [1], [0, 0, 1, 1], [], []>} : vector<8x32xf32>, vector<32x32xf32>, vector<8x32xf32> -> vector<8x32xf32>
    %128 = vector.broadcast %6 : vector<1x32xf32> to vector<8x32xf32>
    %129 = arith.addf %127, %128 : vector<8x32xf32>
    %130 = math.tanh %129 : vector<8x32xf32>
    %131 = arith.subf %110, %130 : vector<8x32xf32>
    %132 = vector.broadcast %126 : f32 to vector<8x32xf32>
    %133 = arith.mulf %130, %132 : vector<8x32xf32>
    %134 = arith.addf %131, %133 : vector<8x32xf32>
    %cst_48 = arith.constant dense<0.000000e+00> : vector<8x128xf32>
    %135 = tpu.matmul %124, %2, %cst_48 {dimension_numbers = #tpu.dot_dimension_numbers<[1], [0], [0], [1], [0, 0, 1, 1], [], []>} : vector<8x32xf32>, vector<32x128xf32>, vector<8x128xf32> -> vector<8x128xf32>
    %cst_49 = arith.constant dense<0.000000e+00> : vector<8x128xf32>
    %136 = tpu.matmul %112, %3, %cst_49 {dimension_numbers = #tpu.dot_dimension_numbers<[1], [0], [0], [1], [0, 0, 1, 1], [], []>} : vector<8x32xf32>, vector<32x128xf32>, vector<8x128xf32> -> vector<8x128xf32>
    %137 = arith.addf %135, %136 : vector<8x128xf32>
    %138 = vector.broadcast %4 : vector<1x128xf32> to vector<8x128xf32>
    %139 = arith.addf %137, %138 : vector<8x128xf32>
    %140 = vector.extract_strided_slice %139 {offsets = [0, 0], sizes = [8, 32], strides = [1, 1]} : vector<8x128xf32> to vector<8x32xf32>
    %141 = arith.negf %140 : vector<8x32xf32>
    %142 = math.exp %141 : vector<8x32xf32>
    %cst_50 = arith.constant 1.000000e+00 : f32
    %143 = vector.broadcast %cst_50 : f32 to vector<8x32xf32>
    %144 = arith.addf %143, %142 : vector<8x32xf32>
    %145 = arith.divf %143, %144 : vector<8x32xf32>
    %146 = vector.extract_strided_slice %139 {offsets = [0, 32], sizes = [8, 32], strides = [1, 1]} : vector<8x128xf32> to vector<8x32xf32>
    %147 = arith.negf %146 : vector<8x32xf32>
    %148 = math.exp %147 : vector<8x32xf32>
    %cst_51 = arith.constant 1.000000e+00 : f32
    %149 = vector.broadcast %cst_51 : f32 to vector<8x32xf32>
    %150 = arith.addf %149, %148 : vector<8x32xf32>
    %151 = arith.divf %149, %150 : vector<8x32xf32>
    %152 = vector.extract_strided_slice %139 {offsets = [0, 64], sizes = [8, 32], strides = [1, 1]} : vector<8x128xf32> to vector<8x32xf32>
    %153 = arith.negf %152 : vector<8x32xf32>
    %154 = math.exp %153 : vector<8x32xf32>
    %cst_52 = arith.constant 1.000000e+00 : f32
    %155 = vector.broadcast %cst_52 : f32 to vector<8x32xf32>
    %156 = arith.addf %155, %154 : vector<8x32xf32>
    %157 = arith.divf %155, %156 : vector<8x32xf32>
    %158 = vector.extract_strided_slice %139 {offsets = [0, 96], sizes = [8, 32], strides = [1, 1]} : vector<8x128xf32> to vector<8x32xf32>
    %159 = math.tanh %158 : vector<8x32xf32>
    %160 = arith.mulf %145, %134 : vector<8x32xf32>
    %161 = arith.mulf %151, %159 : vector<8x32xf32>
    %162 = arith.addf %160, %161 : vector<8x32xf32>
    %163 = math.tanh %162 : vector<8x32xf32>
    %164 = arith.mulf %157, %163 : vector<8x32xf32>
    %c3_i32 = arith.constant 3 : i32
    %165 = arith.index_cast %c3_i32 : i32 to index
    %c0_53 = arith.constant 0 : index
    %c0_54 = arith.constant 0 : index
    %166 = vector.load %arg0[%165, %c0_53, %c0_54] : memref<4x8x16xf32, #tpu.memory_space<vmem>>, vector<1x8x16xf32>
    %167 = vector.shape_cast %166 : vector<1x8x16xf32> to vector<8x16xf32>
    %cst_55 = arith.constant dense<0.000000e+00> : vector<8x32xf32>
    %168 = tpu.matmul %167, %0, %cst_55 {dimension_numbers = #tpu.dot_dimension_numbers<[1], [0], [0], [1], [0, 0, 1, 1], [], []>} : vector<8x16xf32>, vector<16x32xf32>, vector<8x32xf32> -> vector<8x32xf32>
    %169 = vector.broadcast %1 : vector<1x32xf32> to vector<8x32xf32>
    %170 = arith.addf %168, %169 : vector<8x32xf32>
    %cst_56 = arith.constant 0.000000e+00 : f32
    %171 = vector.broadcast %cst_56 : f32 to vector<8x32xf32>
    %172 = arith.maximumf %170, %171 : vector<8x32xf32>
    %173 = arith.index_cast %c3_i32 : i32 to index
    %c0_57 = arith.constant 0 : index
    %c0_58 = arith.constant 0 : index
    %174 = vector.load %arg1[%173, %c0_57, %c0_58] : memref<4x8x8xf32, #tpu.memory_space<vmem>>, vector<1x8x8xf32>
    %175 = vector.shape_cast %174 : vector<1x8x8xf32> to vector<8x8xf32>
    %cst_59 = arith.constant dense<0.000000e+00> : vector<8x32xf32>
    %176 = tpu.matmul %175, %172, %cst_59 {dimension_numbers = #tpu.dot_dimension_numbers<[1], [0], [0], [1], [0, 0, 1, 1], [], []>} : vector<8x8xf32>, vector<8x32xf32>, vector<8x32xf32> -> vector<8x32xf32>
    %177 = arith.index_cast %c3_i32 : i32 to index
    %178 = memref.load %arg2[%177] : memref<4xf32, #tpu.memory_space<smem>>
    %cst_60 = arith.constant dense<0.000000e+00> : vector<8x32xf32>
    %179 = tpu.matmul %162, %5, %cst_60 {dimension_numbers = #tpu.dot_dimension_numbers<[1], [0], [0], [1], [0, 0, 1, 1], [], []>} : vector<8x32xf32>, vector<32x32xf32>, vector<8x32xf32> -> vector<8x32xf32>
    %180 = vector.broadcast %6 : vector<1x32xf32> to vector<8x32xf32>
    %181 = arith.addf %179, %180 : vector<8x32xf32>
    %182 = math.tanh %181 : vector<8x32xf32>
    %183 = arith.subf %162, %182 : vector<8x32xf32>
    %184 = vector.broadcast %178 : f32 to vector<8x32xf32>
    %185 = arith.mulf %182, %184 : vector<8x32xf32>
    %186 = arith.addf %183, %185 : vector<8x32xf32>
    %cst_61 = arith.constant dense<0.000000e+00> : vector<8x128xf32>
    %187 = tpu.matmul %176, %2, %cst_61 {dimension_numbers = #tpu.dot_dimension_numbers<[1], [0], [0], [1], [0, 0, 1, 1], [], []>} : vector<8x32xf32>, vector<32x128xf32>, vector<8x128xf32> -> vector<8x128xf32>
    %cst_62 = arith.constant dense<0.000000e+00> : vector<8x128xf32>
    %188 = tpu.matmul %164, %3, %cst_62 {dimension_numbers = #tpu.dot_dimension_numbers<[1], [0], [0], [1], [0, 0, 1, 1], [], []>} : vector<8x32xf32>, vector<32x128xf32>, vector<8x128xf32> -> vector<8x128xf32>
    %189 = arith.addf %187, %188 : vector<8x128xf32>
    %190 = vector.broadcast %4 : vector<1x128xf32> to vector<8x128xf32>
    %191 = arith.addf %189, %190 : vector<8x128xf32>
    %192 = vector.extract_strided_slice %191 {offsets = [0, 0], sizes = [8, 32], strides = [1, 1]} : vector<8x128xf32> to vector<8x32xf32>
    %193 = arith.negf %192 : vector<8x32xf32>
    %194 = math.exp %193 : vector<8x32xf32>
    %cst_63 = arith.constant 1.000000e+00 : f32
    %195 = vector.broadcast %cst_63 : f32 to vector<8x32xf32>
    %196 = arith.addf %195, %194 : vector<8x32xf32>
    %197 = arith.divf %195, %196 : vector<8x32xf32>
    %198 = vector.extract_strided_slice %191 {offsets = [0, 32], sizes = [8, 32], strides = [1, 1]} : vector<8x128xf32> to vector<8x32xf32>
    %199 = arith.negf %198 : vector<8x32xf32>
    %200 = math.exp %199 : vector<8x32xf32>
    %cst_64 = arith.constant 1.000000e+00 : f32
    %201 = vector.broadcast %cst_64 : f32 to vector<8x32xf32>
    %202 = arith.addf %201, %200 : vector<8x32xf32>
    %203 = arith.divf %201, %202 : vector<8x32xf32>
    %204 = vector.extract_strided_slice %191 {offsets = [0, 64], sizes = [8, 32], strides = [1, 1]} : vector<8x128xf32> to vector<8x32xf32>
    %205 = arith.negf %204 : vector<8x32xf32>
    %206 = math.exp %205 : vector<8x32xf32>
    %cst_65 = arith.constant 1.000000e+00 : f32
    %207 = vector.broadcast %cst_65 : f32 to vector<8x32xf32>
    %208 = arith.addf %207, %206 : vector<8x32xf32>
    %209 = arith.divf %207, %208 : vector<8x32xf32>
    %210 = vector.extract_strided_slice %191 {offsets = [0, 96], sizes = [8, 32], strides = [1, 1]} : vector<8x128xf32> to vector<8x32xf32>
    %211 = math.tanh %210 : vector<8x32xf32>
    %212 = arith.mulf %197, %186 : vector<8x32xf32>
    %213 = arith.mulf %203, %211 : vector<8x32xf32>
    %214 = arith.addf %212, %213 : vector<8x32xf32>
    %215 = math.tanh %214 : vector<8x32xf32>
    %216 = arith.mulf %209, %215 : vector<8x32xf32>
    %c4_i32 = arith.constant 4 : i32
    %c0_66 = arith.constant 0 : index
    %c0_67 = arith.constant 0 : index
    %217 = vector.load %arg10[%c0_66, %c0_67] : memref<32x16xf32, #tpu.memory_space<vmem>>, vector<32x16xf32>
    %cst_68 = arith.constant dense<0.000000e+00> : vector<8x16xf32>
    %218 = tpu.matmul %216, %217, %cst_68 {dimension_numbers = #tpu.dot_dimension_numbers<[1], [0], [0], [1], [0, 0, 1, 1], [], []>} : vector<8x32xf32>, vector<32x16xf32>, vector<8x16xf32> -> vector<8x16xf32>
    %c0_69 = arith.constant 0 : index
    %c0_70 = arith.constant 0 : index
    %219 = vector.load %arg11[%c0_69, %c0_70] : memref<1x16xf32, #tpu.memory_space<vmem>>, vector<1x16xf32>
    %220 = vector.broadcast %219 : vector<1x16xf32> to vector<8x16xf32>
    %221 = arith.addf %218, %220 : vector<8x16xf32>
    %cst_71 = arith.constant 0.000000e+00 : f32
    %222 = vector.broadcast %cst_71 : f32 to vector<8x16xf32>
    %223 = arith.maximumf %221, %222 : vector<8x16xf32>
    %c0_72 = arith.constant 0 : index
    %c0_73 = arith.constant 0 : index
    %224 = vector.load %arg12[%c0_72, %c0_73] : memref<16x128xf32, #tpu.memory_space<vmem>>, vector<16x128xf32>
    %cst_74 = arith.constant dense<0.000000e+00> : vector<8x128xf32>
    %225 = tpu.matmul %223, %224, %cst_74 {dimension_numbers = #tpu.dot_dimension_numbers<[1], [0], [0], [1], [0, 0, 1, 1], [], []>} : vector<8x16xf32>, vector<16x128xf32>, vector<8x128xf32> -> vector<8x128xf32>
    %c0_75 = arith.constant 0 : index
    %c0_76 = arith.constant 0 : index
    %226 = vector.load %arg13[%c0_75, %c0_76] : memref<1x128xf32, #tpu.memory_space<vmem>>, vector<1x128xf32>
    %227 = vector.broadcast %226 : vector<1x128xf32> to vector<8x128xf32>
    %228 = arith.addf %225, %227 : vector<8x128xf32>
    %c0_77 = arith.constant 0 : index
    %c0_78 = arith.constant 0 : index
    %229 = vector.load %arg14[%c0_77, %c0_78] : memref<8x128xf32, #tpu.memory_space<vmem>>, vector<8x128xf32>
    tpu.vector_store %arg14[%c0_77, %c0_78], %228 {strides = array<i32>} : memref<8x128xf32, #tpu.memory_space<vmem>>, vector<8x128xf32>,
    return
  }
}

</mosaic_0001>

<llo_original>
// kernel: tpu_custom_call.1
$region0: #{tpu_custom_call.1}
  #allocation0 [shape = 'u32[]', space=smem, size = 0x4, offset = 0x4, fixed_abs, tag = 'smem constant byte address 0x4 - core index']
  #allocation1 [shape = 'u32[144,128]{1,0:T(1,128)}', space=vmem, size = 0x12000, scoped, tag = 'internal scratch']
  %s0 = inlined_call_operand.vmem [shape: f32[4,8,16], index: 0, kind: input, shape index: {}]
  %s1 = inlined_call_operand.hbm [shape: f32[4,8,8], index: 1, kind: input, shape index: {}]
  %s2 = inlined_call_operand.vmem [shape: f32[4], index: 2, kind: input, shape index: {}]
  %s3 = inlined_call_operand.hbm [shape: f32[16,32], index: 3, kind: input, shape index: {}]
  %s4 = inlined_call_operand.vmem [shape: f32[1,32], index: 4, kind: input, shape index: {}]
  %s5 = inlined_call_operand.vmem [shape: f32[32,128], index: 5, kind: input, shape index: {}]
  %s6 = inlined_call_operand.hbm [shape: f32[32,128], index: 6, kind: input, shape index: {}]
  %s7 = inlined_call_operand.hbm [shape: f32[1,128], index: 7, kind: input, shape index: {}]
  %s8 = inlined_call_operand.hbm [shape: f32[32,32], index: 8, kind: input, shape index: {}]
  %s9 = inlined_call_operand.hbm [shape: f32[1,32], index: 9, kind: input, shape index: {}]
  %s10 = inlined_call_operand.vmem [shape: f32[32,16], index: 10, kind: input, shape index: {}]
  %s11 = inlined_call_operand.vmem [shape: f32[1,16], index: 11, kind: input, shape index: {}]
  %s12 = inlined_call_operand.hbm [shape: f32[16,128], index: 12, kind: input, shape index: {}]
  %s13 = inlined_call_operand.vmem [shape: f32[1,128], index: 13, kind: input, shape index: {}]
  %s14 = inlined_call_operand.hbm [shape: f32[8,128], index: 14, kind: output, shape index: {}]
  %s15 = sld [smem:[#allocation0]]
  $region98: #{tpu_custom_call.1} parent=0
    _
  %s17 = ssub.s32 1, %s15
  %s18 = scalar_select 0, %s17, %s15
  $region1: #{tpu_custom_call.1} parent=0
    #allocation2 [shape = 'u8[16384]{0}', space=vmem, size = 0x4000, scoped, tag = 'input window, operand 1, single buffered']
    #allocation3 [shape = 's32[1]{0}', space=sflag, size = 0x4, scoped, tag = 'scoped memory for tpu_custom_call.1']
    #allocation4 [shape = 's32[1]{0}', space=sflag, size = 0x4, scoped, tag = 'scoped memory for tpu_custom_call.1']
    #allocation5 [shape = 's32[1]{0}', space=sflag, size = 0x4, scoped, tag = 'scoped memory for tpu_custom_call.1']
    #allocation6 [shape = 'u8[512]{0}', space=smem, size = 0x200, scoped, tag = 'input window, operand 2, single buffered']
    #allocation7 [shape = 'u8[8192]{0}', space=vmem, size = 0x2000, scoped, tag = 'input window, operand 3, single buffered']
    #allocation8 [shape = 's32[1]{0}', space=sflag, size = 0x4, scoped, tag = 'scoped memory for tpu_custom_call.1']
    #allocation9 [shape = 'u8[16384]{0}', space=vmem, size = 0x4000, scoped, tag = 'input window, operand 6, single buffered']
    #allocation10 [shape = 'u8[512]{0}', space=vmem, size = 0x400, scoped, tag = 'input window, operand 7, single buffered']
    #allocation11 [shape = 's32[1]{0}', space=sflag, size = 0x4, scoped, tag = 'scoped memory for tpu_custom_call.1']
    #allocation12 [shape = 'u8[16384]{0}', space=vmem, size = 0x4000, scoped, tag = 'input window, operand 8, single buffered']
    #allocation13 [shape = 'u8[512]{0}', space=vmem, size = 0x400, scoped, tag = 'input window, operand 9, single buffered']
    #allocation14 [shape = 's32[1]{0}', space=sflag, size = 0x4, scoped, tag = 'scoped memory for tpu_custom_call.1']
    #allocation15 [shape = 'u8[8192]{0}', space=vmem, size = 0x2000, scoped, tag = 'input window, operand 12, single buffered']
    #allocation16 [shape = 'u8[4096]{0}', space=vmem, size = 0x1000, scoped, tag = 'output window, operand 0, single buffered']
    %19 = vsyncpa [#allocation3], 0
    %20 = vsyncpa [#allocation5], 0
    %21 = vsyncpa [#allocation8], 0
    %22 = vsyncpa [#allocation11], 0
    %23 = vsyncpa [#allocation14], 0
    %24 = vsyncpa [#allocation4], 0
    // Predicated region
    $region2: #{tpu_custom_call.1} parent=1 // pred_check
      _
    $region3: #{tpu_custom_call.1} parent=1 // pred_check_branch
      %26 = sbr.rel (0) target = $region5
    $region4: #{tpu_custom_call.1} parent=1 // pred_region
      _
    $region5: #{tpu_custom_call.1} parent=1 // pred_fallthru
      _
    // Predicated region
    $region6: #{tpu_custom_call.1} parent=1 // pred_check
      _
    $region7: #{tpu_custom_call.1} parent=1 // pred_check_branch
      %28 = sbr.rel (0) target = $region9
    $region8: #{tpu_custom_call.1} parent=1 // pred_region
      %s30 = ssub.s32 512, 512
      %31 = vsyncadd [#allocation3], %s30
      %s32 = sshll.u32 [#allocation2], 4
      %s33 = int_to_ptr.vmem [resolvable:$true] %s32
      %38 = dma.hbm_to_vmem [thread:$0]  %s1, 512, %s33, [#allocation3], 128, 128, 8
    $region9: #{tpu_custom_call.1} parent=1 // pred_fallthru
      _
    // Predicated region
    $region10: #{tpu_custom_call.1} parent=1 // pred_check
      _
    $region11: #{tpu_custom_call.1} parent=1 // pred_check_branch
      %40 = sbr.rel (0) target = $region13
    $region12: #{tpu_custom_call.1} parent=1 // pred_region
      %s42 = ssub.s32 16, 16
      %43 = vsyncadd [#allocation5], %s42
      %s45 = sshll.u32 %s2, 4
      %s46 = int_to_ptr.vmem [resolvable:$true] %s45
      %48 = dma.vmem_to_smem %s46, 16, [#allocation6], [#allocation5]
    $region13: #{tpu_custom_call.1} parent=1 // pred_fallthru
      _
    // Predicated region
    $region14: #{tpu_custom_call.1} parent=1 // pred_check
      _
    $region15: #{tpu_custom_call.1} parent=1 // pred_check_branch
      %50 = sbr.rel (0) target = $region17
    $region16: #{tpu_custom_call.1} parent=1 // pred_region
      %s52 = ssub.s32 256, 256
      %53 = vsyncadd [#allocation8], %s52
      %s54 = sshll.u32 [#allocation7], 4
      %s55 = int_to_ptr.vmem [resolvable:$true] %s54
      %60 = dma.hbm_to_vmem [thread:$0]  %s3, 256, %s55, [#allocation8], 128, 128, 8
    $region17: #{tpu_custom_call.1} parent=1 // pred_fallthru
      _
    // Predicated region
    $region18: #{tpu_custom_call.1} parent=1 // pred_check
      _
    $region19: #{tpu_custom_call.1} parent=1 // pred_check_branch
      %62 = sbr.rel (0) target = $region21
    $region20: #{tpu_custom_call.1} parent=1 // pred_region
      _
    $region21: #{tpu_custom_call.1} parent=1 // pred_fallthru
      _
    // Predicated region
    $region22: #{tpu_custom_call.1} parent=1 // pred_check
      _
    $region23: #{tpu_custom_call.1} parent=1 // pred_check_branch
      %64 = sbr.rel (0) target = $region25
    $region24: #{tpu_custom_call.1} parent=1 // pred_region
      _
    $region25: #{tpu_custom_call.1} parent=1 // pred_fallthru
      _
    // Predicated region
    $region26: #{tpu_custom_call.1} parent=1 // pred_check
      _
    $region27: #{tpu_custom_call.1} parent=1 // pred_check_branch
      %66 = sbr.rel (0) target = $region29
    $region28: #{tpu_custom_call.1} parent=1 // pred_region
      %s68 = ssub.s32 512, 512
      %69 = vsyncadd [#allocation8], %s68
      %s70 = sshll.u32 [#allocation9], 4
      %s71 = int_to_ptr.vmem [resolvable:$true] %s70
      %76 = dma.hbm_to_vmem [thread:$0]  %s6, 512, %s71, [#allocation8], 128, 128, 8
    $region29: #{tpu_custom_call.1} parent=1 // pred_fallthru
      _
    // Predicated region
    $region30: #{tpu_custom_call.1} parent=1 // pred_check
      _
    $region31: #{tpu_custom_call.1} parent=1 // pred_check_branch
      %78 = sbr.rel (0) target = $region33
    $region32: #{tpu_custom_call.1} parent=1 // pred_region
      %s80 = ssub.s32 16, 16
      %81 = vsyncadd [#allocation11], %s80
      %s83 = sshll.u32 [#allocation10], 4
      %s84 = int_to_ptr.vmem [resolvable:$true] %s83
      %86 = dma.hbm_to_vmem [thread:$0]  %s7, 16, %s84, [#allocation11]
    $region33: #{tpu_custom_call.1} parent=1 // pred_fallthru
      _
    // Predicated region
    $region34: #{tpu_custom_call.1} parent=1 // pred_check
      _
    $region35: #{tpu_custom_call.1} parent=1 // pred_check_branch
      %88 = sbr.rel (0) target = $region37
    $region36: #{tpu_custom_call.1} parent=1 // pred_region
      %s90 = ssub.s32 512, 512
      %91 = vsyncadd [#allocation11], %s90
      %s92 = sshll.u32 [#allocation12], 4
      %s93 = int_to_ptr.vmem [resolvable:$true] %s92
      %98 = dma.hbm_to_vmem [thread:$0]  %s8, 512, %s93, [#allocation11], 128, 128, 8
    $region37: #{tpu_custom_call.1} parent=1 // pred_fallthru
      _
    // Predicated region
    $region38: #{tpu_custom_call.1} parent=1 // pred_check
      _
    $region39: #{tpu_custom_call.1} parent=1 // pred_check_branch
      %100 = sbr.rel (0) target = $region41
    $region40: #{tpu_custom_call.1} parent=1 // pred_region
      %s102 = ssub.s32 16, 16
      %103 = vsyncadd [#allocation14], %s102
      %s105 = sshll.u32 [#allocation13], 4
      %s106 = int_to_ptr.vmem [resolvable:$true] %s105
      %108 = dma.hbm_to_vmem [thread:$0]  %s9, 16, %s106, [#allocation14]
    $region41: #{tpu_custom_call.1} parent=1 // pred_fallthru
      _
    // Predicated region
    $region42: #{tpu_custom_call.1} parent=1 // pred_check
      _
    $region43: #{tpu_custom_call.1} parent=1 // pred_check_branch
      %110 = sbr.rel (0) target = $region45
    $region44: #{tpu_custom_call.1} parent=1 // pred_region
      _
    $region45: #{tpu_custom_call.1} parent=1 // pred_fallthru
      _
    // Predicated region
    $region46: #{tpu_custom_call.1} parent=1 // pred_check
      _
    $region47: #{tpu_custom_call.1} parent=1 // pred_check_branch
      %112 = sbr.rel (0) target = $region49
    $region48: #{tpu_custom_call.1} parent=1 // pred_region
      _
    $region49: #{tpu_custom_call.1} parent=1 // pred_fallthru
      _
    // Predicated region
    $region50: #{tpu_custom_call.1} parent=1 // pred_check
      _
    $region51: #{tpu_custom_call.1} parent=1 // pred_check_branch
      %114 = sbr.rel (0) target = $region53
    $region52: #{tpu_custom_call.1} parent=1 // pred_region
      %s116 = ssub.s32 256, 256
      %117 = vsyncadd [#allocation14], %s116
      %s118 = sshll.u32 [#allocation15], 4
      %s119 = int_to_ptr.vmem [resolvable:$true] %s118
      %124 = dma.hbm_to_vmem [thread:$0]  %s12, 256, %s119, [#allocation14], 128, 128, 8
    $region53: #{tpu_custom_call.1} parent=1 // pred_fallthru
      _
    // Predicated region
    $region54: #{tpu_custom_call.1} parent=1 // pred_check
      _
    $region55: #{tpu_custom_call.1} parent=1 // pred_check_branch
      %126 = sbr.rel (0) target = $region57
    $region56: #{tpu_custom_call.1} parent=1 // pred_region
      _
    $region57: #{tpu_custom_call.1} parent=1 // pred_fallthru
      _
    // Predicated region
    $region58: #{tpu_custom_call.1} parent=1 // pred_check
      _
    $region59: #{tpu_custom_call.1} parent=1 // pred_check_branch
      %128 = sbr.rel (0) target = $region61
    $region60: #{tpu_custom_call.1} parent=1 // pred_region
      %129 = dma.done [#allocation3], 512
    $region61: #{tpu_custom_call.1} parent=1 // pred_fallthru
      _
    // Predicated region
    $region62: #{tpu_custom_call.1} parent=1 // pred_check
      _
    $region63: #{tpu_custom_call.1} parent=1 // pred_check_branch
      %131 = sbr.rel (0) target = $region65
    $region64: #{tpu_custom_call.1} parent=1 // pred_region
      %132 = dma.done [#allocation5], 16
    $region65: #{tpu_custom_call.1} parent=1 // pred_fallthru
      _
    // Predicated region
    $region66: #{tpu_custom_call.1} parent=1 // pred_check
      _
    $region67: #{tpu_custom_call.1} parent=1 // pred_check_branch
      %134 = sbr.rel (0) target = $region69
    $region68: #{tpu_custom_call.1} parent=1 // pred_region
      %135 = dma.done [#allocation8], 256
    $region69: #{tpu_custom_call.1} parent=1 // pred_fallthru
      _
    // Predicated region
    $region70: #{tpu_custom_call.1} parent=1 // pred_check
      _
    $region71: #{tpu_custom_call.1} parent=1 // pred_check_branch
      %137 = sbr.rel (0) target = $region73
    $region72: #{tpu_custom_call.1} parent=1 // pred_region
      %138 = dma.done [#allocation8], 512
    $region73: #{tpu_custom_call.1} parent=1 // pred_fallthru
      _
    // Predicated region
    $region74: #{tpu_custom_call.1} parent=1 // pred_check
      _
    $region75: #{tpu_custom_call.1} parent=1 // pred_check_branch
      %140 = sbr.rel (0) target = $region77
    $region76: #{tpu_custom_call.1} parent=1 // pred_region
      %141 = dma.done [#allocation11], 16
    $region77: #{tpu_custom_call.1} parent=1 // pred_fallthru
      _
    // Predicated region
    $region78: #{tpu_custom_call.1} parent=1 // pred_check
      _
    $region79: #{tpu_custom_call.1} parent=1 // pred_check_branch
      %143 = sbr.rel (0) target = $region81
    $region80: #{tpu_custom_call.1} parent=1 // pred_region
      %144 = dma.done [#allocation11], 512
    $region81: #{tpu_custom_call.1} parent=1 // pred_fallthru
      _
    // Predicated region
    $region82: #{tpu_custom_call.1} parent=1 // pred_check
      _
    $region83: #{tpu_custom_call.1} parent=1 // pred_check_branch
      %146 = sbr.rel (0) target = $region85
    $region84: #{tpu_custom_call.1} parent=1 // pred_region
      %147 = dma.done [#allocation14], 16
    $region85: #{tpu_custom_call.1} parent=1 // pred_fallthru
      _
    // Predicated region
    $region86: #{tpu_custom_call.1} parent=1 // pred_check
      _
    $region87: #{tpu_custom_call.1} parent=1 // pred_check_branch
      %149 = sbr.rel (0) target = $region89
    $region88: #{tpu_custom_call.1} parent=1 // pred_region
      %150 = dma.done [#allocation14], 256
    $region89: #{tpu_custom_call.1} parent=1 // pred_fallthru
      _
    %151 = sfence
    %v152 = vld [vmem:[#allocation7] sm:$0xff]
    %v153 = vld [vmem:[#allocation7 + $0x8] sm:$0xff]
    %v154 = vld [vmem:[%s4] sm:$0x1]
    %v155 = vld [vmem:[%s5] sm:$0xff]
    %v156 = vld [vmem:[%s5 + $0x8] sm:$0xff]
    %v157 = vld [vmem:[%s5 + $0x10] sm:$0xff]
    %v158 = vld [vmem:[%s5 + $0x18] sm:$0xff]
    %v159 = vld [vmem:[#allocation9] sm:$0xff]
    %v160 = vld [vmem:[#allocation9 + $0x8] sm:$0xff]
    %v161 = vld [vmem:[#allocation9 + $0x10] sm:$0xff]
    %v162 = vld [vmem:[#allocation9 + $0x18] sm:$0xff]
    %v163 = vld [vmem:[#allocation10] sm:$0x1]
    %v164 = vld [vmem:[#allocation12] sm:$0xff]
    %v165 = vld [vmem:[#allocation12 + $0x8] sm:$0xff]
    %v166 = vld [vmem:[#allocation12 + $0x10] sm:$0xff]
    %v167 = vld [vmem:[#allocation12 + $0x18] sm:$0xff]
    %v168 = vld [vmem:[#allocation13] sm:$0x1]
    %v169 = vld [vmem:[%s0] sm:$0xff]
    %v171 = vlaneseq
    %v172 = vshrl.u32 %v171, 7
    %v173 = vsub.s32 0, %v172
    %v174 = vrot.slane %v154, %v173
    %vm176 = vcmask 130048
    %v178 = vsel %vm176, %v169, 0
    %180 = vmatprep.subr.mxu0 0.0
    %181 = vmatpush1.msra.mxu0 %v152
    %182 = vmatprep.subr.mxu0 0.0
    %183 = vmatpush1.msra.mxu0 %v153
    %184 = vmatprep.subr.mxu0 0.0
    %185 = vmatpush1.msra.mxu0 0.0
    %186 = vmatprep.subr.mxu0 0.0
    %187 = vmatpush1.msra.mxu0 0.0
    %188 = vmatprep.subr.mxu0 0.0
    %189 = vmatpush1.msra.mxu0 0.0
    %190 = vmatprep.subr.mxu0 0.0
    %191 = vmatpush1.msra.mxu0 0.0
    %192 = vmatprep.subr.mxu0 0.0
    %193 = vmatpush1.msra.mxu0 0.0
    %194 = vmatprep.subr.mxu0 0.0
    %195 = vmatpush1.msra.mxu0 0.0
    %196 = vmatprep.subr.mxu0 0.0
    %197 = vmatpush1.msra.mxu0 0.0
    %198 = vmatprep.subr.mxu0 0.0
    %199 = vmatpush1.msra.mxu0 0.0
    %200 = vmatprep.subr.mxu0 0.0
    %201 = vmatpush1.msra.mxu0 0.0
    %202 = vmatprep.subr.mxu0 0.0
    %203 = vmatpush1.msra.mxu0 0.0
    %204 = vmatprep.subr.mxu0 0.0
    %205 = vmatpush1.msra.mxu0 0.0
    %206 = vmatprep.subr.mxu0 0.0
    %207 = vmatpush1.msra.mxu0 0.0
    %208 = vmatprep.subr.mxu0 0.0
    %209 = vmatpush1.msra.mxu0 0.0
    %210 = vmatprep.subr.mxu0 0.0
    %211 = vmatpush1.msra.mxu0 0.0
    %212 = vmatprep.subr.mxu0 0.0
    %213 = vmatpush1.msra.mxu0 0.0
    %214 = vmatprep.subr.mxu0 0.0
    %215 = vmatpush1.msra.mxu0 0.0
    %216 = vmatprep.subr.mxu0 0.0
    %217 = vmatpush1.msra.mxu0 0.0
    %218 = vmatprep.subr.mxu0 0.0
    %219 = vmatpush1.msra.mxu0 0.0
    %220 = vmatprep.subr.mxu0 0.0
    %221 = vmatpush1.msra.mxu0 0.0
    %222 = vmatprep.subr.mxu0 0.0
    %223 = vmatpush1.msra.mxu0 0.0
    %224 = vmatprep.subr.mxu0 0.0
    %225 = vmatpush1.msra.mxu0 0.0
    %226 = vmatprep.subr.mxu0 0.0
    %227 = vmatpush1.msra.mxu0 0.0
    %228 = vmatprep.subr.mxu0 0.0
    %229 = vmatpush1.msra.mxu0 0.0
    %230 = vmatprep.subr.mxu0 0.0
    %231 = vmatpush1.msra.mxu0 0.0
    %232 = vmatprep.subr.mxu0 0.0
    %233 = vmatpush1.msra.mxu0 0.0
    %234 = vmatprep.subr.mxu0 0.0
    %235 = vmatpush1.msra.mxu0 0.0
    %236 = vmatprep.subr.mxu0 0.0
    %237 = vmatpush1.msra.mxu0 0.0
    %238 = vmatprep.subr.mxu0 0.0
    %239 = vmatpush1.msra.mxu0 0.0
    %240 = vmatprep.subr.mxu0 0.0
    %241 = vmatpush1.msra.mxu0 0.0
    %242 = vmatprep.subr.mxu0 0.0
    %243 = vmatpush1.msra.mxu0 0.0
    %244 = vmatprep.mubr.f32.mxu0 0.0
    %245 = vmatmul.mubr.f32.gmra.mrb[0].mxu0 %v178
    %v246 = vpop.f32.mrb[0].mxu0
    %v247 = vadd.f32 %v174, %v246
    %v248 = vpop.f32.mrb[0].mxu0
    %249 = vdwg.mxu0
    %v250 = vmax.f32 %v247, 0.0
    %v251 = vld [vmem:[#allocation2] sm:$0xff]
    %vm252 = vcmask 64512
    %v254 = vsel %vm252, %v251, 0
    %256 = vmatprep.subr.mxu0 0.0
    %257 = vmatpush1.msra.mxu0 %v250
    %258 = vmatprep.subr.mxu0 0.0
    %259 = vmatpush1.msra.mxu0 0.0
    %260 = vmatprep.subr.mxu0 0.0
    %261 = vmatpush1.msra.mxu0 0.0
    %262 = vmatprep.subr.mxu0 0.0
    %263 = vmatpush1.msra.mxu0 0.0
    %264 = vmatprep.subr.mxu0 0.0
    %265 = vmatpush1.msra.mxu0 0.0
    %266 = vmatprep.subr.mxu0 0.0
    %267 = vmatpush1.msra.mxu0 0.0
    %268 = vmatprep.subr.mxu0 0.0
    %269 = vmatpush1.msra.mxu0 0.0
    %270 = vmatprep.subr.mxu0 0.0
    %271 = vmatpush1.msra.mxu0 0.0
    %272 = vmatprep.subr.mxu0 0.0
    %273 = vmatpush1.msra.mxu0 0.0
    %274 = vmatprep.subr.mxu0 0.0
    %275 = vmatpush1.msra.mxu0 0.0
    %276 = vmatprep.subr.mxu0 0.0
    %277 = vmatpush1.msra.mxu0 0.0
    %278 = vmatprep.subr.mxu0 0.0
    %279 = vmatpush1.msra.mxu0 0.0
    %280 = vmatprep.subr.mxu0 0.0
    %281 = vmatpush1.msra.mxu0 0.0
    %282 = vmatprep.subr.mxu0 0.0
    %283 = vmatpush1.msra.mxu0 0.0
    %284 = vmatprep.subr.mxu0 0.0
    %285 = vmatpush1.msra.mxu0 0.0
    %286 = vmatprep.subr.mxu0 0.0
    %287 = vmatpush1.msra.mxu0 0.0
    %288 = vmatprep.subr.mxu0 0.0
    %289 = vmatpush1.msra.mxu0 0.0
    %290 = vmatprep.subr.mxu0 0.0
    %291 = vmatpush1.msra.mxu0 0.0
    %292 = vmatprep.subr.mxu0 0.0
    %293 = vmatpush1.msra.mxu0 0.0
    %294 = vmatprep.subr.mxu0 0.0
    %295 = vmatpush1.msra.mxu0 0.0
    %296 = vmatprep.subr.mxu0 0.0
    %297 = vmatpush1.msra.mxu0 0.0
    %298 = vmatprep.subr.mxu0 0.0
    %299 = vmatpush1.msra.mxu0 0.0
    %300 = vmatprep.subr.mxu0 0.0
    %301 = vmatpush1.msra.mxu0 0.0
    %302 = vmatprep.subr.mxu0 0.0
    %303 = vmatpush1.msra.mxu0 0.0
    %304 = vmatprep.subr.mxu0 0.0
    %305 = vmatpush1.msra.mxu0 0.0
    %306 = vmatprep.subr.mxu0 0.0
    %307 = vmatpush1.msra.mxu0 0.0
    %308 = vmatprep.subr.mxu0 0.0
    %309 = vmatpush1.msra.mxu0 0.0
    %310 = vmatprep.subr.mxu0 0.0
    %311 = vmatpush1.msra.mxu0 0.0
    %312 = vmatprep.subr.mxu0 0.0
    %313 = vmatpush1.msra.mxu0 0.0
    %314 = vmatprep.subr.mxu0 0.0
    %315 = vmatpush1.msra.mxu0 0.0
    %316 = vmatprep.subr.mxu0 0.0
    %317 = vmatpush1.msra.mxu0 0.0
    %318 = vmatprep.subr.mxu0 0.0
    %319 = vmatpush1.msra.mxu0 0.0
    %320 = vmatprep.mubr.f32.mxu0 0.0
    %321 = vmatmul.mubr.f32.gmra.mrb[0].mxu0 %v254
    %v322 = vpop.f32.mrb[0].mxu0
    %v323 = vadd.f32 0.0, %v322
    %v324 = vpop.f32.mrb[0].mxu0
    %325 = vdwg.mxu0
    %s326 = sld [smem:[#allocation6]]
    %v328 = vlaneseq
    %v329 = vshrl.u32 %v328, 7
    %v330 = vsub.s32 0, %v329
    %v331 = vrot.slane %v168, %v330
    %vm333 = vcmask 261120
    %v335 = vsel %vm333, 0.0, 0
    %337 = vmatprep.subr.mxu0 0.0
    %338 = vmatpush1.msra.mxu0 %v164
    %339 = vmatprep.subr.mxu0 0.0
    %340 = vmatpush1.msra.mxu0 %v165
    %341 = vmatprep.subr.mxu0 0.0
    %342 = vmatpush1.msra.mxu0 %v166
    %343 = vmatprep.subr.mxu0 0.0
    %344 = vmatpush1.msra.mxu0 %v167
    %345 = vmatprep.subr.mxu0 0.0
    %346 = vmatpush1.msra.mxu0 0.0
    %347 = vmatprep.subr.mxu0 0.0
    %348 = vmatpush1.msra.mxu0 0.0
    %349 = vmatprep.subr.mxu0 0.0
    %350 = vmatpush1.msra.mxu0 0.0
    %351 = vmatprep.subr.mxu0 0.0
    %352 = vmatpush1.msra.mxu0 0.0
    %353 = vmatprep.subr.mxu0 0.0
    %354 = vmatpush1.msra.mxu0 0.0
    %355 = vmatprep.subr.mxu0 0.0
    %356 = vmatpush1.msra.mxu0 0.0
    %357 = vmatprep.subr.mxu0 0.0
    %358 = vmatpush1.msra.mxu0 0.0
    %359 = vmatprep.subr.mxu0 0.0
    %360 = vmatpush1.msra.mxu0 0.0
    %361 = vmatprep.subr.mxu0 0.0
    %362 = vmatpush1.msra.mxu0 0.0
    %363 = vmatprep.subr.mxu0 0.0
    %364 = vmatpush1.msra.mxu0 0.0
    %365 = vmatprep.subr.mxu0 0.0
    %366 = vmatpush1.msra.mxu0 0.0
    %367 = vmatprep.subr.mxu0 0.0
    %368 = vmatpush1.msra.mxu0 0.0
    %369 = vmatprep.subr.mxu0 0.0
    %370 = vmatpush1.msra.mxu0 0.0
    %371 = vmatprep.subr.mxu0 0.0
    %372 = vmatpush1.msra.mxu0 0.0
    %373 = vmatprep.subr.mxu0 0.0
    %374 = vmatpush1.msra.mxu0 0.0
    %375 = vmatprep.subr.mxu0 0.0
    %376 = vmatpush1.msra.mxu0 0.0
    %377 = vmatprep.subr.mxu0 0.0
    %378 = vmatpush1.msra.mxu0 0.0
    %379 = vmatprep.subr.mxu0 0.0
    %380 = vmatpush1.msra.mxu0 0.0
    %381 = vmatprep.subr.mxu0 0.0
    %382 = vmatpush1.msra.mxu0 0.0
    %383 = vmatprep.subr.mxu0 0.0
    %384 = vmatpush1.msra.mxu0 0.0
    %385 = vmatprep.subr.mxu0 0.0
    %386 = vmatpush1.msra.mxu0 0.0
    %387 = vmatprep.subr.mxu0 0.0
    %388 = vmatpush1.msra.mxu0 0.0
    %389 = vmatprep.subr.mxu0 0.0
    %390 = vmatpush1.msra.mxu0 0.0
    %391 = vmatprep.subr.mxu0 0.0
    %392 = vmatpush1.msra.mxu0 0.0
    %393 = vmatprep.subr.mxu0 0.0
    %394 = vmatpush1.msra.mxu0 0.0
    %395 = vmatprep.subr.mxu0 0.0
    %396 = vmatpush1.msra.mxu0 0.0
    %397 = vmatprep.subr.mxu0 0.0
    %398 = vmatpush1.msra.mxu0 0.0
    %399 = vmatprep.subr.mxu0 0.0
    %400 = vmatpush1.msra.mxu0 0.0
    %401 = vmatprep.mubr.f32.mxu0 0.0
    %402 = vmatmul.mubr.f32.gmra.mrb[0].mxu0 %v335
    %v403 = vpop.f32.mrb[0].mxu0
    %v404 = vadd.f32 %v331, %v403
    %v405 = vpop.f32.mrb[0].mxu0
    %406 = vdwg.mxu0
    %v407 = vtanh.pop %v404
    %v408 = vsub.f32 0.0, %v407
    %v409 = vstv %s326
    %v410 = vmul.f32 %v407, %v409
    %v411 = vadd.f32 %v408, %v410
    %412 = vmatprep.subr.mxu0 0.0
    %413 = vmatpush1.msra.mxu0 %v159
    %414 = vmatprep.subr.mxu0 0.0
    %415 = vmatpush1.msra.mxu0 %v160
    %416 = vmatprep.subr.mxu0 0.0
    %417 = vmatpush1.msra.mxu0 %v161
    %418 = vmatprep.subr.mxu0 0.0
    %419 = vmatpush1.msra.mxu0 %v162
    %420 = vmatprep.subr.mxu0 0.0
    %421 = vmatpush1.msra.mxu0 0.0
    %422 = vmatprep.subr.mxu0 0.0
    %423 = vmatpush1.msra.mxu0 0.0
    %424 = vmatprep.subr.mxu0 0.0
    %425 = vmatpush1.msra.mxu0 0.0
    %426 = vmatprep.subr.mxu0 0.0
    %427 = vmatpush1.msra.mxu0 0.0
    %428 = vmatprep.subr.mxu0 0.0
    %429 = vmatpush1.msra.mxu0 0.0
    %430 = vmatprep.subr.mxu0 0.0
    %431 = vmatpush1.msra.mxu0 0.0
    %432 = vmatprep.subr.mxu0 0.0
    %433 = vmatpush1.msra.mxu0 0.0
    %434 = vmatprep.subr.mxu0 0.0
    %435 = vmatpush1.msra.mxu0 0.0
    %436 = vmatprep.subr.mxu0 0.0
    %437 = vmatpush1.msra.mxu0 0.0
    %438 = vmatprep.subr.mxu0 0.0
    %439 = vmatpush1.msra.mxu0 0.0
    %440 = vmatprep.subr.mxu0 0.0
    %441 = vmatpush1.msra.mxu0 0.0
    %442 = vmatprep.subr.mxu0 0.0
    %443 = vmatpush1.msra.mxu0 0.0
    %444 = vmatprep.subr.mxu0 0.0
    %445 = vmatpush1.msra.mxu0 0.0
    %446 = vmatprep.subr.mxu0 0.0
    %447 = vmatpush1.msra.mxu0 0.0
    %448 = vmatprep.subr.mxu0 0.0
    %449 = vmatpush1.msra.mxu0 0.0
    %450 = vmatprep.subr.mxu0 0.0
    %451 = vmatpush1.msra.mxu0 0.0
    %452 = vmatprep.subr.mxu0 0.0
    %453 = vmatpush1.msra.mxu0 0.0
    %454 = vmatprep.subr.mxu0 0.0
    %455 = vmatpush1.msra.mxu0 0.0
    %456 = vmatprep.subr.mxu0 0.0
    %457 = vmatpush1.msra.mxu0 0.0
    %458 = vmatprep.subr.mxu0 0.0
    %459 = vmatpush1.msra.mxu0 0.0
    %460 = vmatprep.subr.mxu0 0.0
    %461 = vmatpush1.msra.mxu0 0.0
    %462 = vmatprep.subr.mxu0 0.0
    %463 = vmatpush1.msra.mxu0 0.0
    %464 = vmatprep.subr.mxu0 0.0
    %465 = vmatpush1.msra.mxu0 0.0
    %466 = vmatprep.subr.mxu0 0.0
    %467 = vmatpush1.msra.mxu0 0.0
    %468 = vmatprep.subr.mxu0 0.0
    %469 = vmatpush1.msra.mxu0 0.0
    %470 = vmatprep.subr.mxu0 0.0
    %471 = vmatpush1.msra.mxu0 0.0
    %472 = vmatprep.subr.mxu0 0.0
    %473 = vmatpush1.msra.mxu0 0.0
    %474 = vmatprep.subr.mxu0 0.0
    %475 = vmatpush1.msra.mxu0 0.0
    %476 = vmatprep.mubr.f32.mxu0 0.0
    %477 = vmatmul.mubr.f32.gmra.mrb[0].mxu0 %v335
    %v478 = vpop.f32.mrb[0].mxu0
    %v479 = vadd.f32 0.0, %v478
    %v480 = vpop.f32.mrb[0].mxu0
    %481 = vdwg.mxu0
    %v483 = vsel %vm333, %v323, 0
    %485 = vmatprep.subr.mxu0 0.0
    %486 = vmatpush1.msra.mxu0 %v155
    %487 = vmatprep.subr.mxu0 0.0
    %488 = vmatpush1.msra.mxu0 %v156
    %489 = vmatprep.subr.mxu0 0.0
    %490 = vmatpush1.msra.mxu0 %v157
    %491 = vmatprep.subr.mxu0 0.0
    %492 = vmatpush1.msra.mxu0 %v158
    %493 = vmatprep.subr.mxu0 0.0
    %494 = vmatpush1.msra.mxu0 0.0
    %495 = vmatprep.subr.mxu0 0.0
    %496 = vmatpush1.msra.mxu0 0.0
    %497 = vmatprep.subr.mxu0 0.0
    %498 = vmatpush1.msra.mxu0 0.0
    %499 = vmatprep.subr.mxu0 0.0
    %500 = vmatpush1.msra.mxu0 0.0
    %501 = vmatprep.subr.mxu0 0.0
    %502 = vmatpush1.msra.mxu0 0.0
    %503 = vmatprep.subr.mxu0 0.0
    %504 = vmatpush1.msra.mxu0 0.0
    %505 = vmatprep.subr.mxu0 0.0
    %506 = vmatpush1.msra.mxu0 0.0
    %507 = vmatprep.subr.mxu0 0.0
    %508 = vmatpush1.msra.mxu0 0.0
    %509 = vmatprep.subr.mxu0 0.0
    %510 = vmatpush1.msra.mxu0 0.0
    %511 = vmatprep.subr.mxu0 0.0
    %512 = vmatpush1.msra.mxu0 0.0
    %513 = vmatprep.subr.mxu0 0.0
    %514 = vmatpush1.msra.mxu0 0.0
    %515 = vmatprep.subr.mxu0 0.0
    %516 = vmatpush1.msra.mxu0 0.0
    %517 = vmatprep.subr.mxu0 0.0
    %518 = vmatpush1.msra.mxu0 0.0
    %519 = vmatprep.subr.mxu0 0.0
    %520 = vmatpush1.msra.mxu0 0.0
    %521 = vmatprep.subr.mxu0 0.0
    %522 = vmatpush1.msra.mxu0 0.0
    %523 = vmatprep.subr.mxu0 0.0
    %524 = vmatpush1.msra.mxu0 0.0
    %525 = vmatprep.subr.mxu0 0.0
    %526 = vmatpush1.msra.mxu0 0.0
    %527 = vmatprep.subr.mxu0 0.0
    %528 = vmatpush1.msra.mxu0 0.0
    %529 = vmatprep.subr.mxu0 0.0
    %530 = vmatpush1.msra.mxu0 0.0
    %531 = vmatprep.subr.mxu0 0.0
    %532 = vmatpush1.msra.mxu0 0.0
    %533 = vmatprep.subr.mxu0 0.0
    %534 = vmatpush1.msra.mxu0 0.0
    %535 = vmatprep.subr.mxu0 0.0
    %536 = vmatpush1.msra.mxu0 0.0
    %537 = vmatprep.subr.mxu0 0.0
    %538 = vmatpush1.msra.mxu0 0.0
    %539 = vmatprep.subr.mxu0 0.0
    %540 = vmatpush1.msra.mxu0 0.0
    %541 = vmatprep.subr.mxu0 0.0
    %542 = vmatpush1.msra.mxu0 0.0
    %543 = vmatprep.subr.mxu0 0.0
    %544 = vmatpush1.msra.mxu0 0.0
    %545 = vmatprep.subr.mxu0 0.0
    %546 = vmatpush1.msra.mxu0 0.0
    %547 = vmatprep.subr.mxu0 0.0
    %548 = vmatpush1.msra.mxu0 0.0
    %549 = vmatprep.mubr.f32.mxu0 0.0
    %550 = vmatmul.mubr.f32.gmra.mrb[0].mxu0 %v483
    %v551 = vpop.f32.mrb[0].mxu0
    %v552 = vadd.f32 %v479, %v551
    %v553 = vpop.f32.mrb[0].mxu0
    %554 = vdwg.mxu0
    %v556 = vlaneseq
    %v557 = vshrl.u32 %v556, 7
    %v558 = vsub.s32 0, %v557
    %v559 = vrot.slane %v163, %v558
    %v561 = vadd.f32 %v552, %v559
    %v562 = vxor.u32 %v561, 2147483648
    %v563 = vmul.f32 %v562, 1.442695
    %v564 = vpow.pop %v563
    %v565 = vadd.f32 %v564, 1.0
    %v566 = vrcp.pop %v565
    %v567 = vmul.f32 1.0, %v566
    %v568 = vtanh.pop %v561
    %v569 = vmul.f32 %v567, %v411
    %571 = vrot.lane.b32.xlu0 %v568, 64
    %v572 = vpop.permute.xlu0 %571
    %v574 = vmul.f32 %v567, %v572
    %576 = vrot.lane.b32.xlu0 %v574, 96
    %v577 = vpop.permute.xlu0 %576
    %v579 = vadd.f32 %v569, %v577
    %v580 = vtanh.pop %v579
    %582 = vrot.lane.b32.xlu0 %v580, 64
    %v583 = vpop.permute.xlu0 %582
    %v585 = vmul.f32 %v567, %v583
    %s586 = scalar_lea.vmem %s0, 8
    %v587 = vld [vmem:[%s586] sm:$0xff]
    %v589 = vsel %vm176, %v587, 0
    %591 = vmatprep.subr.mxu0 0.0
    %592 = vmatpush1.msra.mxu0 %v152
    %593 = vmatprep.subr.mxu0 0.0
    %594 = vmatpush1.msra.mxu0 %v153
    %595 = vmatprep.subr.mxu0 0.0
    %596 = vmatpush1.msra.mxu0 0.0
    %597 = vmatprep.subr.mxu0 0.0
    %598 = vmatpush1.msra.mxu0 0.0
    %599 = vmatprep.subr.mxu0 0.0
    %600 = vmatpush1.msra.mxu0 0.0
    %601 = vmatprep.subr.mxu0 0.0
    %602 = vmatpush1.msra.mxu0 0.0
    %603 = vmatprep.subr.mxu0 0.0
    %604 = vmatpush1.msra.mxu0 0.0
    %605 = vmatprep.subr.mxu0 0.0
    %606 = vmatpush1.msra.mxu0 0.0
    %607 = vmatprep.subr.mxu0 0.0
    %608 = vmatpush1.msra.mxu0 0.0
    %609 = vmatprep.subr.mxu0 0.0
    %610 = vmatpush1.msra.mxu0 0.0
    %611 = vmatprep.subr.mxu0 0.0
    %612 = vmatpush1.msra.mxu0 0.0
    %613 = vmatprep.subr.mxu0 0.0
    %614 = vmatpush1.msra.mxu0 0.0
    %615 = vmatprep.subr.mxu0 0.0
    %616 = vmatpush1.msra.mxu0 0.0
    %617 = vmatprep.subr.mxu0 0.0
    %618 = vmatpush1.msra.mxu0 0.0
    %619 = vmatprep.subr.mxu0 0.0
    %620 = vmatpush1.msra.mxu0 0.0
    %621 = vmatprep.subr.mxu0 0.0
    %622 = vmatpush1.msra.mxu0 0.0
    %623 = vmatprep.subr.mxu0 0.0
    %624 = vmatpush1.msra.mxu0 0.0
    %625 = vmatprep.subr.mxu0 0.0
    %626 = vmatpush1.msra.mxu0 0.0
    %627 = vmatprep.subr.mxu0 0.0
    %628 = vmatpush1.msra.mxu0 0.0
    %629 = vmatprep.subr.mxu0 0.0
    %630 = vmatpush1.msra.mxu0 0.0
    %631 = vmatprep.subr.mxu0 0.0
    %632 = vmatpush1.msra.mxu0 0.0
    %633 = vmatprep.subr.mxu0 0.0
    %634 = vmatpush1.msra.mxu0 0.0
    %635 = vmatprep.subr.mxu0 0.0
    %636 = vmatpush1.msra.mxu0 0.0
    %637 = vmatprep.subr.mxu0 0.0
    %638 = vmatpush1.msra.mxu0 0.0
    %639 = vmatprep.subr.mxu0 0.0
    %640 = vmatpush1.msra.mxu0 0.0
    %641 = vmatprep.subr.mxu0 0.0
    %642 = vmatpush1.msra.mxu0 0.0
    %643 = vmatprep.subr.mxu0 0.0
    %644 = vmatpush1.msra.mxu0 0.0
    %645 = vmatprep.subr.mxu0 0.0
    %646 = vmatpush1.msra.mxu0 0.0
    %647 = vmatprep.subr.mxu0 0.0
    %648 = vmatpush1.msra.mxu0 0.0
    %649 = vmatprep.subr.mxu0 0.0
    %650 = vmatpush1.msra.mxu0 0.0
    %651 = vmatprep.subr.mxu0 0.0
    %652 = vmatpush1.msra.mxu0 0.0
    %653 = vmatprep.subr.mxu0 0.0
    %654 = vmatpush1.msra.mxu0 0.0
    %655 = vmatprep.mubr.f32.mxu0 0.0
    %656 = vmatmul.mubr.f32.gmra.mrb[0].mxu0 %v589
    %v657 = vpop.f32.mrb[0].mxu0
    %v658 = vadd.f32 %v174, %v657
    %v659 = vpop.f32.mrb[0].mxu0
    %660 = vdwg.mxu0
    %v661 = vmax.f32 %v658, 0.0
    %s662 = scalar_lea.vmem [#allocation2], 8
    %v663 = vld [vmem:[%s662] sm:$0xff]
    %v665 = vsel %vm252, %v663, 0
    %667 = vmatprep.subr.mxu0 0.0
    %668 = vmatpush1.msra.mxu0 %v661
    %669 = vmatprep.subr.mxu0 0.0
    %670 = vmatpush1.msra.mxu0 0.0
    %671 = vmatprep.subr.mxu0 0.0
    %672 = vmatpush1.msra.mxu0 0.0
    %673 = vmatprep.subr.mxu0 0.0
    %674 = vmatpush1.msra.mxu0 0.0
    %675 = vmatprep.subr.mxu0 0.0
    %676 = vmatpush1.msra.mxu0 0.0
    %677 = vmatprep.subr.mxu0 0.0
    %678 = vmatpush1.msra.mxu0 0.0
    %679 = vmatprep.subr.mxu0 0.0
    %680 = vmatpush1.msra.mxu0 0.0
    %681 = vmatprep.subr.mxu0 0.0
    %682 = vmatpush1.msra.mxu0 0.0
    %683 = vmatprep.subr.mxu0 0.0
    %684 = vmatpush1.msra.mxu0 0.0
    %685 = vmatprep.subr.mxu0 0.0
    %686 = vmatpush1.msra.mxu0 0.0
    %687 = vmatprep.subr.mxu0 0.0
    %688 = vmatpush1.msra.mxu0 0.0
    %689 = vmatprep.subr.mxu0 0.0
    %690 = vmatpush1.msra.mxu0 0.0
    %691 = vmatprep.subr.mxu0 0.0
    %692 = vmatpush1.msra.mxu0 0.0
    %693 = vmatprep.subr.mxu0 0.0
    %694 = vmatpush1.msra.mxu0 0.0
    %695 = vmatprep.subr.mxu0 0.0
    %696 = vmatpush1.msra.mxu0 0.0
    %697 = vmatprep.subr.mxu0 0.0
    %698 = vmatpush1.msra.mxu0 0.0
    %699 = vmatprep.subr.mxu0 0.0
    %700 = vmatpush1.msra.mxu0 0.0
    %701 = vmatprep.subr.mxu0 0.0
    %702 = vmatpush1.msra.mxu0 0.0
    %703 = vmatprep.subr.mxu0 0.0
    %704 = vmatpush1.msra.mxu0 0.0
    %705 = vmatprep.subr.mxu0 0.0
    %706 = vmatpush1.msra.mxu0 0.0
    %707 = vmatprep.subr.mxu0 0.0
    %708 = vmatpush1.msra.mxu0 0.0
    %709 = vmatprep.subr.mxu0 0.0
    %710 = vmatpush1.msra.mxu0 0.0
    %711 = vmatprep.subr.mxu0 0.0
    %712 = vmatpush1.msra.mxu0 0.0
    %713 = vmatprep.subr.mxu0 0.0
    %714 = vmatpush1.msra.mxu0 0.0
    %715 = vmatprep.subr.mxu0 0.0
    %716 = vmatpush1.msra.mxu0 0.0
    %717 = vmatprep.subr.mxu0 0.0
    %718 = vmatpush1.msra.mxu0 0.0
    %719 = vmatprep.subr.mxu0 0.0
    %720 = vmatpush1.msra.mxu0 0.0
    %721 = vmatprep.subr.mxu0 0.0
    %722 = vmatpush1.msra.mxu0 0.0
    %723 = vmatprep.subr.mxu0 0.0
    %724 = vmatpush1.msra.mxu0 0.0
    %725 = vmatprep.subr.mxu0 0.0
    %726 = vmatpush1.msra.mxu0 0.0
    %727 = vmatprep.subr.mxu0 0.0
    %728 = vmatpush1.msra.mxu0 0.0
    %729 = vmatprep.subr.mxu0 0.0
    %730 = vmatpush1.msra.mxu0 0.0
    %731 = vmatprep.mubr.f32.mxu0 0.0
    %732 = vmatmul.mubr.f32.gmra.mrb[0].mxu0 %v665
    %v733 = vpop.f32.mrb[0].mxu0
    %v734 = vadd.f32 0.0, %v733
    %v735 = vpop.f32.mrb[0].mxu0
    %736 = vdwg.mxu0
    %s737 = sld [smem:[#allocation6 + $0x1]]
    %v739 = vsel %vm333, %v579, 0
    %741 = vmatprep.subr.mxu0 0.0
    %742 = vmatpush1.msra.mxu0 %v164
    %743 = vmatprep.subr.mxu0 0.0
    %744 = vmatpush1.msra.mxu0 %v165
    %745 = vmatprep.subr.mxu0 0.0
    %746 = vmatpush1.msra.mxu0 %v166
    %747 = vmatprep.subr.mxu0 0.0
    %748 = vmatpush1.msra.mxu0 %v167
    %749 = vmatprep.subr.mxu0 0.0
    %750 = vmatpush1.msra.mxu0 0.0
    %751 = vmatprep.subr.mxu0 0.0
    %752 = vmatpush1.msra.mxu0 0.0
    %753 = vmatprep.subr.mxu0 0.0
    %754 = vmatpush1.msra.mxu0 0.0
    %755 = vmatprep.subr.mxu0 0.0
    %756 = vmatpush1.msra.mxu0 0.0
    %757 = vmatprep.subr.mxu0 0.0
    %758 = vmatpush1.msra.mxu0 0.0
    %759 = vmatprep.subr.mxu0 0.0
    %760 = vmatpush1.msra.mxu0 0.0
    %761 = vmatprep.subr.mxu0 0.0
    %762 = vmatpush1.msra.mxu0 0.0
    %763 = vmatprep.subr.mxu0 0.0
    %764 = vmatpush1.msra.mxu0 0.0
    %765 = vmatprep.subr.mxu0 0.0
    %766 = vmatpush1.msra.mxu0 0.0
    %767 = vmatprep.subr.mxu0 0.0
    %768 = vmatpush1.msra.mxu0 0.0
    %769 = vmatprep.subr.mxu0 0.0
    %770 = vmatpush1.msra.mxu0 0.0
    %771 = vmatprep.subr.mxu0 0.0
    %772 = vmatpush1.msra.mxu0 0.0
    %773 = vmatprep.subr.mxu0 0.0
    %774 = vmatpush1.msra.mxu0 0.0
    %775 = vmatprep.subr.mxu0 0.0
    %776 = vmatpush1.msra.mxu0 0.0
    %777 = vmatprep.subr.mxu0 0.0
    %778 = vmatpush1.msra.mxu0 0.0
    %779 = vmatprep.subr.mxu0 0.0
    %780 = vmatpush1.msra.mxu0 0.0
    %781 = vmatprep.subr.mxu0 0.0
    %782 = vmatpush1.msra.mxu0 0.0
    %783 = vmatprep.subr.mxu0 0.0
    %784 = vmatpush1.msra.mxu0 0.0
    %785 = vmatprep.subr.mxu0 0.0
    %786 = vmatpush1.msra.mxu0 0.0
    %787 = vmatprep.subr.mxu0 0.0
    %788 = vmatpush1.msra.mxu0 0.0
    %789 = vmatprep.subr.mxu0 0.0
    %790 = vmatpush1.msra.mxu0 0.0
    %791 = vmatprep.subr.mxu0 0.0
    %792 = vmatpush1.msra.mxu0 0.0
    %793 = vmatprep.subr.mxu0 0.0
    %794 = vmatpush1.msra.mxu0 0.0
    %795 = vmatprep.subr.mxu0 0.0
    %796 = vmatpush1.msra.mxu0 0.0
    %797 = vmatprep.subr.mxu0 0.0
    %798 = vmatpush1.msra.mxu0 0.0
    %799 = vmatprep.subr.mxu0 0.0
    %800 = vmatpush1.msra.mxu0 0.0
    %801 = vmatprep.subr.mxu0 0.0
    %802 = vmatpush1.msra.mxu0 0.0
    %803 = vmatprep.subr.mxu0 0.0
    %804 = vmatpush1.msra.mxu0 0.0
    %805 = vmatprep.mubr.f32.mxu0 0.0
    %806 = vmatmul.mubr.f32.gmra.mrb[0].mxu0 %v739
    %v807 = vpop.f32.mrb[0].mxu0
    %v808 = vadd.f32 %v331, %v807
    %v809 = vpop.f32.mrb[0].mxu0
    %810 = vdwg.mxu0
    %v811 = vtanh.pop %v808
    %v812 = vsub.f32 %v579, %v811
    %v813 = vstv %s737
    %v814 = vmul.f32 %v811, %v813
    %v815 = vadd.f32 %v812, %v814
    %817 = vrot.lane.b32.xlu0 %v585, 64
    %v818 = vpop.permute.xlu0 %817
    %v819 = vsel %vm333, %v818, 0
    %821 = vmatprep.subr.mxu0 0.0
    %822 = vmatpush1.msra.mxu0 %v159
    %823 = vmatprep.subr.mxu0 0.0
    %824 = vmatpush1.msra.mxu0 %v160
    %825 = vmatprep.subr.mxu0 0.0
    %826 = vmatpush1.msra.mxu0 %v161
    %827 = vmatprep.subr.mxu0 0.0
    %828 = vmatpush1.msra.mxu0 %v162
    %829 = vmatprep.subr.mxu0 0.0
    %830 = vmatpush1.msra.mxu0 0.0
    %831 = vmatprep.subr.mxu0 0.0
    %832 = vmatpush1.msra.mxu0 0.0
    %833 = vmatprep.subr.mxu0 0.0
    %834 = vmatpush1.msra.mxu0 0.0
    %835 = vmatprep.subr.mxu0 0.0
    %836 = vmatpush1.msra.mxu0 0.0
    %837 = vmatprep.subr.mxu0 0.0
    %838 = vmatpush1.msra.mxu0 0.0
    %839 = vmatprep.subr.mxu0 0.0
    %840 = vmatpush1.msra.mxu0 0.0
    %841 = vmatprep.subr.mxu0 0.0
    %842 = vmatpush1.msra.mxu0 0.0
    %843 = vmatprep.subr.mxu0 0.0
    %844 = vmatpush1.msra.mxu0 0.0
    %845 = vmatprep.subr.mxu0 0.0
    %846 = vmatpush1.msra.mxu0 0.0
    %847 = vmatprep.subr.mxu0 0.0
    %848 = vmatpush1.msra.mxu0 0.0
    %849 = vmatprep.subr.mxu0 0.0
    %850 = vmatpush1.msra.mxu0 0.0
    %851 = vmatprep.subr.mxu0 0.0
    %852 = vmatpush1.msra.mxu0 0.0
    %853 = vmatprep.subr.mxu0 0.0
    %854 = vmatpush1.msra.mxu0 0.0
    %855 = vmatprep.subr.mxu0 0.0
    %856 = vmatpush1.msra.mxu0 0.0
    %857 = vmatprep.subr.mxu0 0.0
    %858 = vmatpush1.msra.mxu0 0.0
    %859 = vmatprep.subr.mxu0 0.0
    %860 = vmatpush1.msra.mxu0 0.0
    %861 = vmatprep.subr.mxu0 0.0
    %862 = vmatpush1.msra.mxu0 0.0
    %863 = vmatprep.subr.mxu0 0.0
    %864 = vmatpush1.msra.mxu0 0.0
    %865 = vmatprep.subr.mxu0 0.0
    %866 = vmatpush1.msra.mxu0 0.0
    %867 = vmatprep.subr.mxu0 0.0
    %868 = vmatpush1.msra.mxu0 0.0
    %869 = vmatprep.subr.mxu0 0.0
    %870 = vmatpush1.msra.mxu0 0.0
    %871 = vmatprep.subr.mxu0 0.0
    %872 = vmatpush1.msra.mxu0 0.0
    %873 = vmatprep.subr.mxu0 0.0
    %874 = vmatpush1.msra.mxu0 0.0
    %875 = vmatprep.subr.mxu0 0.0
    %876 = vmatpush1.msra.mxu0 0.0
    %877 = vmatprep.subr.mxu0 0.0
    %878 = vmatpush1.msra.mxu0 0.0
    %879 = vmatprep.subr.mxu0 0.0
    %880 = vmatpush1.msra.mxu0 0.0
    %881 = vmatprep.subr.mxu0 0.0
    %882 = vmatpush1.msra.mxu0 0.0
    %883 = vmatprep.subr.mxu0 0.0
    %884 = vmatpush1.msra.mxu0 0.0
    %885 = vmatprep.mubr.f32.mxu0 0.0
    %886 = vmatmul.mubr.f32.gmra.mrb[0].mxu0 %v819
    %v887 = vpop.f32.mrb[0].mxu0
    %v888 = vadd.f32 0.0, %v887
    %v889 = vpop.f32.mrb[0].mxu0
    %890 = vdwg.mxu0
    %v892 = vsel %vm333, %v734, 0
    %894 = vmatprep.subr.mxu0 0.0
    %895 = vmatpush1.msra.mxu0 %v155
    %896 = vmatprep.subr.mxu0 0.0
    %897 = vmatpush1.msra.mxu0 %v156
    %898 = vmatprep.subr.mxu0 0.0
    %899 = vmatpush1.msra.mxu0 %v157
    %900 = vmatprep.subr.mxu0 0.0
    %901 = vmatpush1.msra.mxu0 %v158
    %902 = vmatprep.subr.mxu0 0.0
    %903 = vmatpush1.msra.mxu0 0.0
    %904 = vmatprep.subr.mxu0 0.0
    %905 = vmatpush1.msra.mxu0 0.0
    %906 = vmatprep.subr.mxu0 0.0
    %907 = vmatpush1.msra.mxu0 0.0
    %908 = vmatprep.subr.mxu0 0.0
    %909 = vmatpush1.msra.mxu0 0.0
    %910 = vmatprep.subr.mxu0 0.0
    %911 = vmatpush1.msra.mxu0 0.0
    %912 = vmatprep.subr.mxu0 0.0
    %913 = vmatpush1.msra.mxu0 0.0
    %914 = vmatprep.subr.mxu0 0.0
    %915 = vmatpush1.msra.mxu0 0.0
    %916 = vmatprep.subr.mxu0 0.0
    %917 = vmatpush1.msra.mxu0 0.0
    %918 = vmatprep.subr.mxu0 0.0
    %919 = vmatpush1.msra.mxu0 0.0
    %920 = vmatprep.subr.mxu0 0.0
    %921 = vmatpush1.msra.mxu0 0.0
    %922 = vmatprep.subr.mxu0 0.0
    %923 = vmatpush1.msra.mxu0 0.0
    %924 = vmatprep.subr.mxu0 0.0
    %925 = vmatpush1.msra.mxu0 0.0
    %926 = vmatprep.subr.mxu0 0.0
    %927 = vmatpush1.msra.mxu0 0.0
    %928 = vmatprep.subr.mxu0 0.0
    %929 = vmatpush1.msra.mxu0 0.0
    %930 = vmatprep.subr.mxu0 0.0
    %931 = vmatpush1.msra.mxu0 0.0
    %932 = vmatprep.subr.mxu0 0.0
    %933 = vmatpush1.msra.mxu0 0.0
    %934 = vmatprep.subr.mxu0 0.0
    %935 = vmatpush1.msra.mxu0 0.0
    %936 = vmatprep.subr.mxu0 0.0
    %937 = vmatpush1.msra.mxu0 0.0
    %938 = vmatprep.subr.mxu0 0.0
    %939 = vmatpush1.msra.mxu0 0.0
    %940 = vmatprep.subr.mxu0 0.0
    %941 = vmatpush1.msra.mxu0 0.0
    %942 = vmatprep.subr.mxu0 0.0
    %943 = vmatpush1.msra.mxu0 0.0
    %944 = vmatprep.subr.mxu0 0.0
    %945 = vmatpush1.msra.mxu0 0.0
    %946 = vmatprep.subr.mxu0 0.0
    %947 = vmatpush1.msra.mxu0 0.0
    %948 = vmatprep.subr.mxu0 0.0
    %949 = vmatpush1.msra.mxu0 0.0
    %950 = vmatprep.subr.mxu0 0.0
    %951 = vmatpush1.msra.mxu0 0.0
    %952 = vmatprep.subr.mxu0 0.0
    %953 = vmatpush1.msra.mxu0 0.0
    %954 = vmatprep.subr.mxu0 0.0
    %955 = vmatpush1.msra.mxu0 0.0
    %956 = vmatprep.subr.mxu0 0.0
    %957 = vmatpush1.msra.mxu0 0.0
    %958 = vmatprep.mubr.f32.mxu0 0.0
    %959 = vmatmul.mubr.f32.gmra.mrb[0].mxu0 %v892
    %v960 = vpop.f32.mrb[0].mxu0
    %v961 = vadd.f32 %v888, %v960
    %v962 = vpop.f32.mrb[0].mxu0
    %963 = vdwg.mxu0
    %v964 = vadd.f32 %v961, %v559
    %v965 = vxor.u32 %v964, 2147483648
    %v966 = vmul.f32 %v965, 1.442695
    %v967 = vpow.pop %v966
    %v968 = vadd.f32 %v967, 1.0
    %v969 = vrcp.pop %v968
    %v970 = vmul.f32 1.0, %v969
    %v971 = vtanh.pop %v964
    %v972 = vmul.f32 %v970, %v815
    %974 = vrot.lane.b32.xlu0 %v971, 64
    %v975 = vpop.permute.xlu0 %974
    %v977 = vmul.f32 %v970, %v975
    %979 = vrot.lane.b32.xlu0 %v977, 96
    %v980 = vpop.permute.xlu0 %979
    %v982 = vadd.f32 %v972, %v980
    %v983 = vtanh.pop %v982
    %985 = vrot.lane.b32.xlu0 %v983, 64
    %v986 = vpop.permute.xlu0 %985
    %v988 = vmul.f32 %v970, %v986
    %s989 = scalar_lea.vmem %s0, 16
    %v990 = vld [vmem:[%s989] sm:$0xff]
    %v992 = vsel %vm176, %v990, 0
    %994 = vmatprep.subr.mxu0 0.0
    %995 = vmatpush1.msra.mxu0 %v152
    %996 = vmatprep.subr.mxu0 0.0
    %997 = vmatpush1.msra.mxu0 %v153
    %998 = vmatprep.subr.mxu0 0.0
    %999 = vmatpush1.msra.mxu0 0.0
    %1000 = vmatprep.subr.mxu0 0.0
    %1001 = vmatpush1.msra.mxu0 0.0
    %1002 = vmatprep.subr.mxu0 0.0
    %1003 = vmatpush1.msra.mxu0 0.0
    %1004 = vmatprep.subr.mxu0 0.0
    %1005 = vmatpush1.msra.mxu0 0.0
    %1006 = vmatprep.subr.mxu0 0.0
    %1007 = vmatpush1.msra.mxu0 0.0
    %1008 = vmatprep.subr.mxu0 0.0
    %1009 = vmatpush1.msra.mxu0 0.0
    %1010 = vmatprep.subr.mxu0 0.0
    %1011 = vmatpush1.msra.mxu0 0.0
    %1012 = vmatprep.subr.mxu0 0.0
    %1013 = vmatpush1.msra.mxu0 0.0
    %1014 = vmatprep.subr.mxu0 0.0
    %1015 = vmatpush1.msra.mxu0 0.0
    %1016 = vmatprep.subr.mxu0 0.0
    %1017 = vmatpush1.msra.mxu0 0.0
    %1018 = vmatprep.subr.mxu0 0.0
    %1019 = vmatpush1.msra.mxu0 0.0
    %1020 = vmatprep.subr.mxu0 0.0
    %1021 = vmatpush1.msra.mxu0 0.0
    %1022 = vmatprep.subr.mxu0 0.0
    %1023 = vmatpush1.msra.mxu0 0.0
    %1024 = vmatprep.subr.mxu0 0.0
    %1025 = vmatpush1.msra.mxu0 0.0
    %1026 = vmatprep.subr.mxu0 0.0
    %1027 = vmatpush1.msra.mxu0 0.0
    %1028 = vmatprep.subr.mxu0 0.0
    %1029 = vmatpush1.msra.mxu0 0.0
    %1030 = vmatprep.subr.mxu0 0.0
    %1031 = vmatpush1.msra.mxu0 0.0
    %1032 = vmatprep.subr.mxu0 0.0
    %1033 = vmatpush1.msra.mxu0 0.0
    %1034 = vmatprep.subr.mxu0 0.0
    %1035 = vmatpush1.msra.mxu0 0.0
    %1036 = vmatprep.subr.mxu0 0.0
    %1037 = vmatpush1.msra.mxu0 0.0
    %1038 = vmatprep.subr.mxu0 0.0
    %1039 = vmatpush1.msra.mxu0 0.0
    %1040 = vmatprep.subr.mxu0 0.0
    %1041 = vmatpush1.msra.mxu0 0.0
    %1042 = vmatprep.subr.mxu0 0.0
    %1043 = vmatpush1.msra.mxu0 0.0
    %1044 = vmatprep.subr.mxu0 0.0
    %1045 = vmatpush1.msra.mxu0 0.0
    %1046 = vmatprep.subr.mxu0 0.0
    %1047 = vmatpush1.msra.mxu0 0.0
    %1048 = vmatprep.subr.mxu0 0.0
    %1049 = vmatpush1.msra.mxu0 0.0
    %1050 = vmatprep.subr.mxu0 0.0
    %1051 = vmatpush1.msra.mxu0 0.0
    %1052 = vmatprep.subr.mxu0 0.0
    %1053 = vmatpush1.msra.mxu0 0.0
    %1054 = vmatprep.subr.mxu0 0.0
    %1055 = vmatpush1.msra.mxu0 0.0
    %1056 = vmatprep.subr.mxu0 0.0
    %1057 = vmatpush1.msra.mxu0 0.0
    %1058 = vmatprep.mubr.f32.mxu0 0.0
    %1059 = vmatmul.mubr.f32.gmra.mrb[0].mxu0 %v992
    %v1060 = vpop.f32.mrb[0].mxu0
    %v1061 = vadd.f32 %v174, %v1060
    %v1062 = vpop.f32.mrb[0].mxu0
    %1063 = vdwg.mxu0
    %v1064 = vmax.f32 %v1061, 0.0
    %s1065 = scalar_lea.vmem [#allocation2], 16
    %v1066 = vld [vmem:[%s1065] sm:$0xff]
    %v1068 = vsel %vm252, %v1066, 0
    %1070 = vmatprep.subr.mxu0 0.0
    %1071 = vmatpush1.msra.mxu0 %v1064
    %1072 = vmatprep.subr.mxu0 0.0
    %1073 = vmatpush1.msra.mxu0 0.0
    %1074 = vmatprep.subr.mxu0 0.0
    %1075 = vmatpush1.msra.mxu0 0.0
    %1076 = vmatprep.subr.mxu0 0.0
    %1077 = vmatpush1.msra.mxu0 0.0
    %1078 = vmatprep.subr.mxu0 0.0
    %1079 = vmatpush1.msra.mxu0 0.0
    %1080 = vmatprep.subr.mxu0 0.0
    %1081 = vmatpush1.msra.mxu0 0.0
    %1082 = vmatprep.subr.mxu0 0.0
    %1083 = vmatpush1.msra.mxu0 0.0
    %1084 = vmatprep.subr.mxu0 0.0
    %1085 = vmatpush1.msra.mxu0 0.0
    %1086 = vmatprep.subr.mxu0 0.0
    %1087 = vmatpush1.msra.mxu0 0.0
    %1088 = vmatprep.subr.mxu0 0.0
    %1089 = vmatpush1.msra.mxu0 0.0
    %1090 = vmatprep.subr.mxu0 0.0
    %1091 = vmatpush1.msra.mxu0 0.0
    %1092 = vmatprep.subr.mxu0 0.0
    %1093 = vmatpush1.msra.mxu0 0.0
    %1094 = vmatprep.subr.mxu0 0.0
    %1095 = vmatpush1.msra.mxu0 0.0
    %1096 = vmatprep.subr.mxu0 0.0
    %1097 = vmatpush1.msra.mxu0 0.0
    %1098 = vmatprep.subr.mxu0 0.0
    %1099 = vmatpush1.msra.mxu0 0.0
    %1100 = vmatprep.subr.mxu0 0.0
    %1101 = vmatpush1.msra.mxu0 0.0
    %1102 = vmatprep.subr.mxu0 0.0
    %1103 = vmatpush1.msra.mxu0 0.0
    %1104 = vmatprep.subr.mxu0 0.0
    %1105 = vmatpush1.msra.mxu0 0.0
    %1106 = vmatprep.subr.mxu0 0.0
    %1107 = vmatpush1.msra.mxu0 0.0
    %1108 = vmatprep.subr.mxu0 0.0
    %1109 = vmatpush1.msra.mxu0 0.0
    %1110 = vmatprep.subr.mxu0 0.0
    %1111 = vmatpush1.msra.mxu0 0.0
    %1112 = vmatprep.subr.mxu0 0.0
    %1113 = vmatpush1.msra.mxu0 0.0
    %1114 = vmatprep.subr.mxu0 0.0
    %1115 = vmatpush1.msra.mxu0 0.0
    %1116 = vmatprep.subr.mxu0 0.0
    %1117 = vmatpush1.msra.mxu0 0.0
    %1118 = vmatprep.subr.mxu0 0.0
    %1119 = vmatpush1.msra.mxu0 0.0
    %1120 = vmatprep.subr.mxu0 0.0
    %1121 = vmatpush1.msra.mxu0 0.0
    %1122 = vmatprep.subr.mxu0 0.0
    %1123 = vmatpush1.msra.mxu0 0.0
    %1124 = vmatprep.subr.mxu0 0.0
    %1125 = vmatpush1.msra.mxu0 0.0
    %1126 = vmatprep.subr.mxu0 0.0
    %1127 = vmatpush1.msra.mxu0 0.0
    %1128 = vmatprep.subr.mxu0 0.0
    %1129 = vmatpush1.msra.mxu0 0.0
    %1130 = vmatprep.subr.mxu0 0.0
    %1131 = vmatpush1.msra.mxu0 0.0
    %1132 = vmatprep.subr.mxu0 0.0
    %1133 = vmatpush1.msra.mxu0 0.0
    %1134 = vmatprep.mubr.f32.mxu0 0.0
    %1135 = vmatmul.mubr.f32.gmra.mrb[0].mxu0 %v1068
    %v1136 = vpop.f32.mrb[0].mxu0
    %v1137 = vadd.f32 0.0, %v1136
    %v1138 = vpop.f32.mrb[0].mxu0
    %1139 = vdwg.mxu0
    %s1140 = sld [smem:[#allocation6 + $0x2]]
    %v1142 = vsel %vm333, %v982, 0
    %1144 = vmatprep.subr.mxu0 0.0
    %1145 = vmatpush1.msra.mxu0 %v164
    %1146 = vmatprep.subr.mxu0 0.0
    %1147 = vmatpush1.msra.mxu0 %v165
    %1148 = vmatprep.subr.mxu0 0.0
    %1149 = vmatpush1.msra.mxu0 %v166
    %1150 = vmatprep.subr.mxu0 0.0
    %1151 = vmatpush1.msra.mxu0 %v167
    %1152 = vmatprep.subr.mxu0 0.0
    %1153 = vmatpush1.msra.mxu0 0.0
    %1154 = vmatprep.subr.mxu0 0.0
    %1155 = vmatpush1.msra.mxu0 0.0
    %1156 = vmatprep.subr.mxu0 0.0
    %1157 = vmatpush1.msra.mxu0 0.0
    %1158 = vmatprep.subr.mxu0 0.0
    %1159 = vmatpush1.msra.mxu0 0.0
    %1160 = vmatprep.subr.mxu0 0.0
    %1161 = vmatpush1.msra.mxu0 0.0
    %1162 = vmatprep.subr.mxu0 0.0
    %1163 = vmatpush1.msra.mxu0 0.0
    %1164 = vmatprep.subr.mxu0 0.0
    %1165 = vmatpush1.msra.mxu0 0.0
    %1166 = vmatprep.subr.mxu0 0.0
    %1167 = vmatpush1.msra.mxu0 0.0
    %1168 = vmatprep.subr.mxu0 0.0
    %1169 = vmatpush1.msra.mxu0 0.0
    %1170 = vmatprep.subr.mxu0 0.0
    %1171 = vmatpush1.msra.mxu0 0.0
    %1172 = vmatprep.subr.mxu0 0.0
    %1173 = vmatpush1.msra.mxu0 0.0
    %1174 = vmatprep.subr.mxu0 0.0
    %1175 = vmatpush1.msra.mxu0 0.0
    %1176 = vmatprep.subr.mxu0 0.0
    %1177 = vmatpush1.msra.mxu0 0.0
    %1178 = vmatprep.subr.mxu0 0.0
    %1179 = vmatpush1.msra.mxu0 0.0
    %1180 = vmatprep.subr.mxu0 0.0
    %1181 = vmatpush1.msra.mxu0 0.0
    %1182 = vmatprep.subr.mxu0 0.0
    %1183 = vmatpush1.msra.mxu0 0.0
    %1184 = vmatprep.subr.mxu0 0.0
    %1185 = vmatpush1.msra.mxu0 0.0
    %1186 = vmatprep.subr.mxu0 0.0
    %1187 = vmatpush1.msra.mxu0 0.0
    %1188 = vmatprep.subr.mxu0 0.0
    %1189 = vmatpush1.msra.mxu0 0.0
    %1190 = vmatprep.subr.mxu0 0.0
    %1191 = vmatpush1.msra.mxu0 0.0
    %1192 = vmatprep.subr.mxu0 0.0
    %1193 = vmatpush1.msra.mxu0 0.0
    %1194 = vmatprep.subr.mxu0 0.0
    %1195 = vmatpush1.msra.mxu0 0.0
    %1196 = vmatprep.subr.mxu0 0.0
    %1197 = vmatpush1.msra.mxu0 0.0
    %1198 = vmatprep.subr.mxu0 0.0
    %1199 = vmatpush1.msra.mxu0 0.0
    %1200 = vmatprep.subr.mxu0 0.0
    %1201 = vmatpush1.msra.mxu0 0.0
    %1202 = vmatprep.subr.mxu0 0.0
    %1203 = vmatpush1.msra.mxu0 0.0
    %1204 = vmatprep.subr.mxu0 0.0
    %1205 = vmatpush1.msra.mxu0 0.0
    %1206 = vmatprep.subr.mxu0 0.0
    %1207 = vmatpush1.msra.mxu0 0.0
    %1208 = vmatprep.mubr.f32.mxu0 0.0
    %1209 = vmatmul.mubr.f32.gmra.mrb[0].mxu0 %v1142
    %v1210 = vpop.f32.mrb[0].mxu0
    %v1211 = vadd.f32 %v331, %v1210
    %v1212 = vpop.f32.mrb[0].mxu0
    %1213 = vdwg.mxu0
    %v1214 = vtanh.pop %v1211
    %v1215 = vsub.f32 %v982, %v1214
    %v1216 = vstv %s1140
    %v1217 = vmul.f32 %v1214, %v1216
    %v1218 = vadd.f32 %v1215, %v1217
    %1220 = vrot.lane.b32.xlu0 %v988, 64
    %v1221 = vpop.permute.xlu0 %1220
    %v1222 = vsel %vm333, %v1221, 0
    %1224 = vmatprep.subr.mxu0 0.0
    %1225 = vmatpush1.msra.mxu0 %v159
    %1226 = vmatprep.subr.mxu0 0.0
    %1227 = vmatpush1.msra.mxu0 %v160
    %1228 = vmatprep.subr.mxu0 0.0
    %1229 = vmatpush1.msra.mxu0 %v161
    %1230 = vmatprep.subr.mxu0 0.0
    %1231 = vmatpush1.msra.mxu0 %v162
    %1232 = vmatprep.subr.mxu0 0.0
    %1233 = vmatpush1.msra.mxu0 0.0
    %1234 = vmatprep.subr.mxu0 0.0
    %1235 = vmatpush1.msra.mxu0 0.0
    %1236 = vmatprep.subr.mxu0 0.0
    %1237 = vmatpush1.msra.mxu0 0.0
    %1238 = vmatprep.subr.mxu0 0.0
    %1239 = vmatpush1.msra.mxu0 0.0
    %1240 = vmatprep.subr.mxu0 0.0
    %1241 = vmatpush1.msra.mxu0 0.0
    %1242 = vmatprep.subr.mxu0 0.0
    %1243 = vmatpush1.msra.mxu0 0.0
    %1244 = vmatprep.subr.mxu0 0.0
    %1245 = vmatpush1.msra.mxu0 0.0
    %1246 = vmatprep.subr.mxu0 0.0
    %1247 = vmatpush1.msra.mxu0 0.0
    %1248 = vmatprep.subr.mxu0 0.0
    %1249 = vmatpush1.msra.mxu0 0.0
    %1250 = vmatprep.subr.mxu0 0.0
    %1251 = vmatpush1.msra.mxu0 0.0
    %1252 = vmatprep.subr.mxu0 0.0
    %1253 = vmatpush1.msra.mxu0 0.0
    %1254 = vmatprep.subr.mxu0 0.0
    %1255 = vmatpush1.msra.mxu0 0.0
    %1256 = vmatprep.subr.mxu0 0.0
    %1257 = vmatpush1.msra.mxu0 0.0
    %1258 = vmatprep.subr.mxu0 0.0
    %1259 = vmatpush1.msra.mxu0 0.0
    %1260 = vmatprep.subr.mxu0 0.0
    %1261 = vmatpush1.msra.mxu0 0.0
    %1262 = vmatprep.subr.mxu0 0.0
    %1263 = vmatpush1.msra.mxu0 0.0
    %1264 = vmatprep.subr.mxu0 0.0
    %1265 = vmatpush1.msra.mxu0 0.0
    %1266 = vmatprep.subr.mxu0 0.0
    %1267 = vmatpush1.msra.mxu0 0.0
    %1268 = vmatprep.subr.mxu0 0.0
    %1269 = vmatpush1.msra.mxu0 0.0
    %1270 = vmatprep.subr.mxu0 0.0
    %1271 = vmatpush1.msra.mxu0 0.0
    %1272 = vmatprep.subr.mxu0 0.0
    %1273 = vmatpush1.msra.mxu0 0.0
    %1274 = vmatprep.subr.mxu0 0.0
    %1275 = vmatpush1.msra.mxu0 0.0
    %1276 = vmatprep.subr.mxu0 0.0
    %1277 = vmatpush1.msra.mxu0 0.0
    %1278 = vmatprep.subr.mxu0 0.0
    %1279 = vmatpush1.msra.mxu0 0.0
    %1280 = vmatprep.subr.mxu0 0.0
    %1281 = vmatpush1.msra.mxu0 0.0
    %1282 = vmatprep.subr.mxu0 0.0
    %1283 = vmatpush1.msra.mxu0 0.0
    %1284 = vmatprep.subr.mxu0 0.0
    %1285 = vmatpush1.msra.mxu0 0.0
    %1286 = vmatprep.subr.mxu0 0.0
    %1287 = vmatpush1.msra.mxu0 0.0
    %1288 = vmatprep.mubr.f32.mxu0 0.0
    %1289 = vmatmul.mubr.f32.gmra.mrb[0].mxu0 %v1222
    %v1290 = vpop.f32.mrb[0].mxu0
    %v1291 = vadd.f32 0.0, %v1290
    %v1292 = vpop.f32.mrb[0].mxu0
    %1293 = vdwg.mxu0
    %v1295 = vsel %vm333, %v1137, 0
    %1297 = vmatprep.subr.mxu0 0.0
    %1298 = vmatpush1.msra.mxu0 %v155
    %1299 = vmatprep.subr.mxu0 0.0
    %1300 = vmatpush1.msra.mxu0 %v156
    %1301 = vmatprep.subr.mxu0 0.0
    %1302 = vmatpush1.msra.mxu0 %v157
    %1303 = vmatprep.subr.mxu0 0.0
    %1304 = vmatpush1.msra.mxu0 %v158
    %1305 = vmatprep.subr.mxu0 0.0
    %1306 = vmatpush1.msra.mxu0 0.0
    %1307 = vmatprep.subr.mxu0 0.0
    %1308 = vmatpush1.msra.mxu0 0.0
    %1309 = vmatprep.subr.mxu0 0.0
    %1310 = vmatpush1.msra.mxu0 0.0
    %1311 = vmatprep.subr.mxu0 0.0
    %1312 = vmatpush1.msra.mxu0 0.0
    %1313 = vmatprep.subr.mxu0 0.0
    %1314 = vmatpush1.msra.mxu0 0.0
    %1315 = vmatprep.subr.mxu0 0.0
    %1316 = vmatpush1.msra.mxu0 0.0
    %1317 = vmatprep.subr.mxu0 0.0
    %1318 = vmatpush1.msra.mxu0 0.0
    %1319 = vmatprep.subr.mxu0 0.0
    %1320 = vmatpush1.msra.mxu0 0.0
    %1321 = vmatprep.subr.mxu0 0.0
    %1322 = vmatpush1.msra.mxu0 0.0
    %1323 = vmatprep.subr.mxu0 0.0
    %1324 = vmatpush1.msra.mxu0 0.0
    %1325 = vmatprep.subr.mxu0 0.0
    %1326 = vmatpush1.msra.mxu0 0.0
    %1327 = vmatprep.subr.mxu0 0.0
    %1328 = vmatpush1.msra.mxu0 0.0
    %1329 = vmatprep.subr.mxu0 0.0
    %1330 = vmatpush1.msra.mxu0 0.0
    %1331 = vmatprep.subr.mxu0 0.0
    %1332 = vmatpush1.msra.mxu0 0.0
    %1333 = vmatprep.subr.mxu0 0.0
    %1334 = vmatpush1.msra.mxu0 0.0
    %1335 = vmatprep.subr.mxu0 0.0
    %1336 = vmatpush1.msra.mxu0 0.0
    %1337 = vmatprep.subr.mxu0 0.0
    %1338 = vmatpush1.msra.mxu0 0.0
    %1339 = vmatprep.subr.mxu0 0.0
    %1340 = vmatpush1.msra.mxu0 0.0
    %1341 = vmatprep.subr.mxu0 0.0
    %1342 = vmatpush1.msra.mxu0 0.0
    %1343 = vmatprep.subr.mxu0 0.0
    %1344 = vmatpush1.msra.mxu0 0.0
    %1345 = vmatprep.subr.mxu0 0.0
    %1346 = vmatpush1.msra.mxu0 0.0
    %1347 = vmatprep.subr.mxu0 0.0
    %1348 = vmatpush1.msra.mxu0 0.0
    %1349 = vmatprep.subr.mxu0 0.0
    %1350 = vmatpush1.msra.mxu0 0.0
    %1351 = vmatprep.subr.mxu0 0.0
    %1352 = vmatpush1.msra.mxu0 0.0
    %1353 = vmatprep.subr.mxu0 0.0
    %1354 = vmatpush1.msra.mxu0 0.0
    %1355 = vmatprep.subr.mxu0 0.0
    %1356 = vmatpush1.msra.mxu0 0.0
    %1357 = vmatprep.subr.mxu0 0.0
    %1358 = vmatpush1.msra.mxu0 0.0
    %1359 = vmatprep.subr.mxu0 0.0
    %1360 = vmatpush1.msra.mxu0 0.0
    %1361 = vmatprep.mubr.f32.mxu0 0.0
    %1362 = vmatmul.mubr.f32.gmra.mrb[0].mxu0 %v1295
    %v1363 = vpop.f32.mrb[0].mxu0
    %v1364 = vadd.f32 %v1291, %v1363
    %v1365 = vpop.f32.mrb[0].mxu0
    %1366 = vdwg.mxu0
    %v1367 = vadd.f32 %v1364, %v559
    %v1368 = vxor.u32 %v1367, 2147483648
    %v1369 = vmul.f32 %v1368, 1.442695
    %v1370 = vpow.pop %v1369
    %v1371 = vadd.f32 %v1370, 1.0
    %v1372 = vrcp.pop %v1371
    %v1373 = vmul.f32 1.0, %v1372
    %v1374 = vtanh.pop %v1367
    %v1375 = vmul.f32 %v1373, %v1218
    %1377 = vrot.lane.b32.xlu0 %v1374, 64
    %v1378 = vpop.permute.xlu0 %1377
    %v1380 = vmul.f32 %v1373, %v1378
    %1382 = vrot.lane.b32.xlu0 %v1380, 96
    %v1383 = vpop.permute.xlu0 %1382
    %v1385 = vadd.f32 %v1375, %v1383
    %v1386 = vtanh.pop %v1385
    %1388 = vrot.lane.b32.xlu0 %v1386, 64
    %v1389 = vpop.permute.xlu0 %1388
    %v1391 = vmul.f32 %v1373, %v1389
    %s1392 = scalar_lea.vmem %s0, 24
    %v1393 = vld [vmem:[%s1392] sm:$0xff]
    %v1395 = vsel %vm176, %v1393, 0
    %1397 = vmatprep.subr.mxu0 0.0
    %1398 = vmatpush1.msra.mxu0 %v152
    %1399 = vmatprep.subr.mxu0 0.0
    %1400 = vmatpush1.msra.mxu0 %v153
    %1401 = vmatprep.subr.mxu0 0.0
    %1402 = vmatpush1.msra.mxu0 0.0
    %1403 = vmatprep.subr.mxu0 0.0
    %1404 = vmatpush1.msra.mxu0 0.0
    %1405 = vmatprep.subr.mxu0 0.0
    %1406 = vmatpush1.msra.mxu0 0.0
    %1407 = vmatprep.subr.mxu0 0.0
    %1408 = vmatpush1.msra.mxu0 0.0
    %1409 = vmatprep.subr.mxu0 0.0
    %1410 = vmatpush1.msra.mxu0 0.0
    %1411 = vmatprep.subr.mxu0 0.0
    %1412 = vmatpush1.msra.mxu0 0.0
    %1413 = vmatprep.subr.mxu0 0.0
    %1414 = vmatpush1.msra.mxu0 0.0
    %1415 = vmatprep.subr.mxu0 0.0
    %1416 = vmatpush1.msra.mxu0 0.0
    %1417 = vmatprep.subr.mxu0 0.0
    %1418 = vmatpush1.msra.mxu0 0.0
    %1419 = vmatprep.subr.mxu0 0.0
    %1420 = vmatpush1.msra.mxu0 0.0
    %1421 = vmatprep.subr.mxu0 0.0
    %1422 = vmatpush1.msra.mxu0 0.0
    %1423 = vmatprep.subr.mxu0 0.0
    %1424 = vmatpush1.msra.mxu0 0.0
    %1425 = vmatprep.subr.mxu0 0.0
    %1426 = vmatpush1.msra.mxu0 0.0
    %1427 = vmatprep.subr.mxu0 0.0
    %1428 = vmatpush1.msra.mxu0 0.0
    %1429 = vmatprep.subr.mxu0 0.0
    %1430 = vmatpush1.msra.mxu0 0.0
    %1431 = vmatprep.subr.mxu0 0.0
    %1432 = vmatpush1.msra.mxu0 0.0
    %1433 = vmatprep.subr.mxu0 0.0
    %1434 = vmatpush1.msra.mxu0 0.0
    %1435 = vmatprep.subr.mxu0 0.0
    %1436 = vmatpush1.msra.mxu0 0.0
    %1437 = vmatprep.subr.mxu0 0.0
    %1438 = vmatpush1.msra.mxu0 0.0
    %1439 = vmatprep.subr.mxu0 0.0
    %1440 = vmatpush1.msra.mxu0 0.0
    %1441 = vmatprep.subr.mxu0 0.0
    %1442 = vmatpush1.msra.mxu0 0.0
    %1443 = vmatprep.subr.mxu0 0.0
    %1444 = vmatpush1.msra.mxu0 0.0
    %1445 = vmatprep.subr.mxu0 0.0
    %1446 = vmatpush1.msra.mxu0 0.0
    %1447 = vmatprep.subr.mxu0 0.0
    %1448 = vmatpush1.msra.mxu0 0.0
    %1449 = vmatprep.subr.mxu0 0.0
    %1450 = vmatpush1.msra.mxu0 0.0
    %1451 = vmatprep.subr.mxu0 0.0
    %1452 = vmatpush1.msra.mxu0 0.0
    %1453 = vmatprep.subr.mxu0 0.0
    %1454 = vmatpush1.msra.mxu0 0.0
    %1455 = vmatprep.subr.mxu0 0.0
    %1456 = vmatpush1.msra.mxu0 0.0
    %1457 = vmatprep.subr.mxu0 0.0
    %1458 = vmatpush1.msra.mxu0 0.0
    %1459 = vmatprep.subr.mxu0 0.0
    %1460 = vmatpush1.msra.mxu0 0.0
    %1461 = vmatprep.mubr.f32.mxu0 0.0
    %1462 = vmatmul.mubr.f32.gmra.mrb[0].mxu0 %v1395
    %v1463 = vpop.f32.mrb[0].mxu0
    %v1464 = vadd.f32 %v174, %v1463
    %v1465 = vpop.f32.mrb[0].mxu0
    %1466 = vdwg.mxu0
    %v1467 = vmax.f32 %v1464, 0.0
    %s1468 = scalar_lea.vmem [#allocation2], 24
    %v1469 = vld [vmem:[%s1468] sm:$0xff]
    %v1471 = vsel %vm252, %v1469, 0
    %1473 = vmatprep.subr.mxu0 0.0
    %1474 = vmatpush1.msra.mxu0 %v1467
    %1475 = vmatprep.subr.mxu0 0.0
    %1476 = vmatpush1.msra.mxu0 0.0
    %1477 = vmatprep.subr.mxu0 0.0
    %1478 = vmatpush1.msra.mxu0 0.0
    %1479 = vmatprep.subr.mxu0 0.0
    %1480 = vmatpush1.msra.mxu0 0.0
    %1481 = vmatprep.subr.mxu0 0.0
    %1482 = vmatpush1.msra.mxu0 0.0
    %1483 = vmatprep.subr.mxu0 0.0
    %1484 = vmatpush1.msra.mxu0 0.0
    %1485 = vmatprep.subr.mxu0 0.0
    %1486 = vmatpush1.msra.mxu0 0.0
    %1487 = vmatprep.subr.mxu0 0.0
    %1488 = vmatpush1.msra.mxu0 0.0
    %1489 = vmatprep.subr.mxu0 0.0
    %1490 = vmatpush1.msra.mxu0 0.0
    %1491 = vmatprep.subr.mxu0 0.0
    %1492 = vmatpush1.msra.mxu0 0.0
    %1493 = vmatprep.subr.mxu0 0.0
    %1494 = vmatpush1.msra.mxu0 0.0
    %1495 = vmatprep.subr.mxu0 0.0
    %1496 = vmatpush1.msra.mxu0 0.0
    %1497 = vmatprep.subr.mxu0 0.0
    %1498 = vmatpush1.msra.mxu0 0.0
    %1499 = vmatprep.subr.mxu0 0.0
    %1500 = vmatpush1.msra.mxu0 0.0
    %1501 = vmatprep.subr.mxu0 0.0
    %1502 = vmatpush1.msra.mxu0 0.0
    %1503 = vmatprep.subr.mxu0 0.0
    %1504 = vmatpush1.msra.mxu0 0.0
    %1505 = vmatprep.subr.mxu0 0.0
    %1506 = vmatpush1.msra.mxu0 0.0
    %1507 = vmatprep.subr.mxu0 0.0
    %1508 = vmatpush1.msra.mxu0 0.0
    %1509 = vmatprep.subr.mxu0 0.0
    %1510 = vmatpush1.msra.mxu0 0.0
    %1511 = vmatprep.subr.mxu0 0.0
    %1512 = vmatpush1.msra.mxu0 0.0
    %1513 = vmatprep.subr.mxu0 0.0
    %1514 = vmatpush1.msra.mxu0 0.0
    %1515 = vmatprep.subr.mxu0 0.0
    %1516 = vmatpush1.msra.mxu0 0.0
    %1517 = vmatprep.subr.mxu0 0.0
    %1518 = vmatpush1.msra.mxu0 0.0
    %1519 = vmatprep.subr.mxu0 0.0
    %1520 = vmatpush1.msra.mxu0 0.0
    %1521 = vmatprep.subr.mxu0 0.0
    %1522 = vmatpush1.msra.mxu0 0.0
    %1523 = vmatprep.subr.mxu0 0.0
    %1524 = vmatpush1.msra.mxu0 0.0
    %1525 = vmatprep.subr.mxu0 0.0
    %1526 = vmatpush1.msra.mxu0 0.0
    %1527 = vmatprep.subr.mxu0 0.0
    %1528 = vmatpush1.msra.mxu0 0.0
    %1529 = vmatprep.subr.mxu0 0.0
    %1530 = vmatpush1.msra.mxu0 0.0
    %1531 = vmatprep.subr.mxu0 0.0
    %1532 = vmatpush1.msra.mxu0 0.0
    %1533 = vmatprep.subr.mxu0 0.0
    %1534 = vmatpush1.msra.mxu0 0.0
    %1535 = vmatprep.subr.mxu0 0.0
    %1536 = vmatpush1.msra.mxu0 0.0
    %1537 = vmatprep.mubr.f32.mxu0 0.0
    %1538 = vmatmul.mubr.f32.gmra.mrb[0].mxu0 %v1471
    %v1539 = vpop.f32.mrb[0].mxu0
    %v1540 = vadd.f32 0.0, %v1539
    %v1541 = vpop.f32.mrb[0].mxu0
    %1542 = vdwg.mxu0
    %s1543 = sld [smem:[#allocation6 + $0x3]]
    %v1545 = vsel %vm333, %v1385, 0
    %1547 = vmatprep.subr.mxu0 0.0
    %1548 = vmatpush1.msra.mxu0 %v164
    %1549 = vmatprep.subr.mxu0 0.0
    %1550 = vmatpush1.msra.mxu0 %v165
    %1551 = vmatprep.subr.mxu0 0.0
    %1552 = vmatpush1.msra.mxu0 %v166
    %1553 = vmatprep.subr.mxu0 0.0
    %1554 = vmatpush1.msra.mxu0 %v167
    %1555 = vmatprep.subr.mxu0 0.0
    %1556 = vmatpush1.msra.mxu0 0.0
    %1557 = vmatprep.subr.mxu0 0.0
    %1558 = vmatpush1.msra.mxu0 0.0
    %1559 = vmatprep.subr.mxu0 0.0
    %1560 = vmatpush1.msra.mxu0 0.0
    %1561 = vmatprep.subr.mxu0 0.0
    %1562 = vmatpush1.msra.mxu0 0.0
    %1563 = vmatprep.subr.mxu0 0.0
    %1564 = vmatpush1.msra.mxu0 0.0
    %1565 = vmatprep.subr.mxu0 0.0
    %1566 = vmatpush1.msra.mxu0 0.0
    %1567 = vmatprep.subr.mxu0 0.0
    %1568 = vmatpush1.msra.mxu0 0.0
    %1569 = vmatprep.subr.mxu0 0.0
    %1570 = vmatpush1.msra.mxu0 0.0
    %1571 = vmatprep.subr.mxu0 0.0
    %1572 = vmatpush1.msra.mxu0 0.0
    %1573 = vmatprep.subr.mxu0 0.0
    %1574 = vmatpush1.msra.mxu0 0.0
    %1575 = vmatprep.subr.mxu0 0.0
    %1576 = vmatpush1.msra.mxu0 0.0
    %1577 = vmatprep.subr.mxu0 0.0
    %1578 = vmatpush1.msra.mxu0 0.0
    %1579 = vmatprep.subr.mxu0 0.0
    %1580 = vmatpush1.msra.mxu0 0.0
    %1581 = vmatprep.subr.mxu0 0.0
    %1582 = vmatpush1.msra.mxu0 0.0
    %1583 = vmatprep.subr.mxu0 0.0
    %1584 = vmatpush1.msra.mxu0 0.0
    %1585 = vmatprep.subr.mxu0 0.0
    %1586 = vmatpush1.msra.mxu0 0.0
    %1587 = vmatprep.subr.mxu0 0.0
    %1588 = vmatpush1.msra.mxu0 0.0
    %1589 = vmatprep.subr.mxu0 0.0
    %1590 = vmatpush1.msra.mxu0 0.0
    %1591 = vmatprep.subr.mxu0 0.0
    %1592 = vmatpush1.msra.mxu0 0.0
    %1593 = vmatprep.subr.mxu0 0.0
    %1594 = vmatpush1.msra.mxu0 0.0
    %1595 = vmatprep.subr.mxu0 0.0
    %1596 = vmatpush1.msra.mxu0 0.0
    %1597 = vmatprep.subr.mxu0 0.0
    %1598 = vmatpush1.msra.mxu0 0.0
    %1599 = vmatprep.subr.mxu0 0.0
    %1600 = vmatpush1.msra.mxu0 0.0
    %1601 = vmatprep.subr.mxu0 0.0
    %1602 = vmatpush1.msra.mxu0 0.0
    %1603 = vmatprep.subr.mxu0 0.0
    %1604 = vmatpush1.msra.mxu0 0.0
    %1605 = vmatprep.subr.mxu0 0.0
    %1606 = vmatpush1.msra.mxu0 0.0
    %1607 = vmatprep.subr.mxu0 0.0
    %1608 = vmatpush1.msra.mxu0 0.0
    %1609 = vmatprep.subr.mxu0 0.0
    %1610 = vmatpush1.msra.mxu0 0.0
    %1611 = vmatprep.mubr.f32.mxu0 0.0
    %1612 = vmatmul.mubr.f32.gmra.mrb[0].mxu0 %v1545
    %v1613 = vpop.f32.mrb[0].mxu0
    %v1614 = vadd.f32 %v331, %v1613
    %v1615 = vpop.f32.mrb[0].mxu0
    %1616 = vdwg.mxu0
    %v1617 = vtanh.pop %v1614
    %v1618 = vsub.f32 %v1385, %v1617
    %v1619 = vstv %s1543
    %v1620 = vmul.f32 %v1617, %v1619
    %v1621 = vadd.f32 %v1618, %v1620
    %1623 = vrot.lane.b32.xlu0 %v1391, 64
    %v1624 = vpop.permute.xlu0 %1623
    %v1625 = vsel %vm333, %v1624, 0
    %1627 = vmatprep.subr.mxu0 0.0
    %1628 = vmatpush1.msra.mxu0 %v159
    %1629 = vmatprep.subr.mxu0 0.0
    %1630 = vmatpush1.msra.mxu0 %v160
    %1631 = vmatprep.subr.mxu0 0.0
    %1632 = vmatpush1.msra.mxu0 %v161
    %1633 = vmatprep.subr.mxu0 0.0
    %1634 = vmatpush1.msra.mxu0 %v162
    %1635 = vmatprep.subr.mxu0 0.0
    %1636 = vmatpush1.msra.mxu0 0.0
    %1637 = vmatprep.subr.mxu0 0.0
    %1638 = vmatpush1.msra.mxu0 0.0
    %1639 = vmatprep.subr.mxu0 0.0
    %1640 = vmatpush1.msra.mxu0 0.0
    %1641 = vmatprep.subr.mxu0 0.0
    %1642 = vmatpush1.msra.mxu0 0.0
    %1643 = vmatprep.subr.mxu0 0.0
    %1644 = vmatpush1.msra.mxu0 0.0
    %1645 = vmatprep.subr.mxu0 0.0
    %1646 = vmatpush1.msra.mxu0 0.0
    %1647 = vmatprep.subr.mxu0 0.0
    %1648 = vmatpush1.msra.mxu0 0.0
    %1649 = vmatprep.subr.mxu0 0.0
    %1650 = vmatpush1.msra.mxu0 0.0
    %1651 = vmatprep.subr.mxu0 0.0
    %1652 = vmatpush1.msra.mxu0 0.0
    %1653 = vmatprep.subr.mxu0 0.0
    %1654 = vmatpush1.msra.mxu0 0.0
    %1655 = vmatprep.subr.mxu0 0.0
    %1656 = vmatpush1.msra.mxu0 0.0
    %1657 = vmatprep.subr.mxu0 0.0
    %1658 = vmatpush1.msra.mxu0 0.0
    %1659 = vmatprep.subr.mxu0 0.0
    %1660 = vmatpush1.msra.mxu0 0.0
    %1661 = vmatprep.subr.mxu0 0.0
    %1662 = vmatpush1.msra.mxu0 0.0
    %1663 = vmatprep.subr.mxu0 0.0
    %1664 = vmatpush1.msra.mxu0 0.0
    %1665 = vmatprep.subr.mxu0 0.0
    %1666 = vmatpush1.msra.mxu0 0.0
    %1667 = vmatprep.subr.mxu0 0.0
    %1668 = vmatpush1.msra.mxu0 0.0
    %1669 = vmatprep.subr.mxu0 0.0
    %1670 = vmatpush1.msra.mxu0 0.0
    %1671 = vmatprep.subr.mxu0 0.0
    %1672 = vmatpush1.msra.mxu0 0.0
    %1673 = vmatprep.subr.mxu0 0.0
    %1674 = vmatpush1.msra.mxu0 0.0
    %1675 = vmatprep.subr.mxu0 0.0
    %1676 = vmatpush1.msra.mxu0 0.0
    %1677 = vmatprep.subr.mxu0 0.0
    %1678 = vmatpush1.msra.mxu0 0.0
    %1679 = vmatprep.subr.mxu0 0.0
    %1680 = vmatpush1.msra.mxu0 0.0
    %1681 = vmatprep.subr.mxu0 0.0
    %1682 = vmatpush1.msra.mxu0 0.0
    %1683 = vmatprep.subr.mxu0 0.0
    %1684 = vmatpush1.msra.mxu0 0.0
    %1685 = vmatprep.subr.mxu0 0.0
    %1686 = vmatpush1.msra.mxu0 0.0
    %1687 = vmatprep.subr.mxu0 0.0
    %1688 = vmatpush1.msra.mxu0 0.0
    %1689 = vmatprep.subr.mxu0 0.0
    %1690 = vmatpush1.msra.mxu0 0.0
    %1691 = vmatprep.mubr.f32.mxu0 0.0
    %1692 = vmatmul.mubr.f32.gmra.mrb[0].mxu0 %v1625
    %v1693 = vpop.f32.mrb[0].mxu0
    %v1694 = vadd.f32 0.0, %v1693
    %v1695 = vpop.f32.mrb[0].mxu0
    %1696 = vdwg.mxu0
    %v1698 = vsel %vm333, %v1540, 0
    %1700 = vmatprep.subr.mxu0 0.0
    %1701 = vmatpush1.msra.mxu0 %v155
    %1702 = vmatprep.subr.mxu0 0.0
    %1703 = vmatpush1.msra.mxu0 %v156
    %1704 = vmatprep.subr.mxu0 0.0
    %1705 = vmatpush1.msra.mxu0 %v157
    %1706 = vmatprep.subr.mxu0 0.0
    %1707 = vmatpush1.msra.mxu0 %v158
    %1708 = vmatprep.subr.mxu0 0.0
    %1709 = vmatpush1.msra.mxu0 0.0
    %1710 = vmatprep.subr.mxu0 0.0
    %1711 = vmatpush1.msra.mxu0 0.0
    %1712 = vmatprep.subr.mxu0 0.0
    %1713 = vmatpush1.msra.mxu0 0.0
    %1714 = vmatprep.subr.mxu0 0.0
    %1715 = vmatpush1.msra.mxu0 0.0
    %1716 = vmatprep.subr.mxu0 0.0
    %1717 = vmatpush1.msra.mxu0 0.0
    %1718 = vmatprep.subr.mxu0 0.0
    %1719 = vmatpush1.msra.mxu0 0.0
    %1720 = vmatprep.subr.mxu0 0.0
    %1721 = vmatpush1.msra.mxu0 0.0
    %1722 = vmatprep.subr.mxu0 0.0
    %1723 = vmatpush1.msra.mxu0 0.0
    %1724 = vmatprep.subr.mxu0 0.0
    %1725 = vmatpush1.msra.mxu0 0.0
    %1726 = vmatprep.subr.mxu0 0.0
    %1727 = vmatpush1.msra.mxu0 0.0
    %1728 = vmatprep.subr.mxu0 0.0
    %1729 = vmatpush1.msra.mxu0 0.0
    %1730 = vmatprep.subr.mxu0 0.0
    %1731 = vmatpush1.msra.mxu0 0.0
    %1732 = vmatprep.subr.mxu0 0.0
    %1733 = vmatpush1.msra.mxu0 0.0
    %1734 = vmatprep.subr.mxu0 0.0
    %1735 = vmatpush1.msra.mxu0 0.0
    %1736 = vmatprep.subr.mxu0 0.0
    %1737 = vmatpush1.msra.mxu0 0.0
    %1738 = vmatprep.subr.mxu0 0.0
    %1739 = vmatpush1.msra.mxu0 0.0
    %1740 = vmatprep.subr.mxu0 0.0
    %1741 = vmatpush1.msra.mxu0 0.0
    %1742 = vmatprep.subr.mxu0 0.0
    %1743 = vmatpush1.msra.mxu0 0.0
    %1744 = vmatprep.subr.mxu0 0.0
    %1745 = vmatpush1.msra.mxu0 0.0
    %1746 = vmatprep.subr.mxu0 0.0
    %1747 = vmatpush1.msra.mxu0 0.0
    %1748 = vmatprep.subr.mxu0 0.0
    %1749 = vmatpush1.msra.mxu0 0.0
    %1750 = vmatprep.subr.mxu0 0.0
    %1751 = vmatpush1.msra.mxu0 0.0
    %1752 = vmatprep.subr.mxu0 0.0
    %1753 = vmatpush1.msra.mxu0 0.0
    %1754 = vmatprep.subr.mxu0 0.0
    %1755 = vmatpush1.msra.mxu0 0.0
    %1756 = vmatprep.subr.mxu0 0.0
    %1757 = vmatpush1.msra.mxu0 0.0
    %1758 = vmatprep.subr.mxu0 0.0
    %1759 = vmatpush1.msra.mxu0 0.0
    %1760 = vmatprep.subr.mxu0 0.0
    %1761 = vmatpush1.msra.mxu0 0.0
    %1762 = vmatprep.subr.mxu0 0.0
    %1763 = vmatpush1.msra.mxu0 0.0
    %1764 = vmatprep.mubr.f32.mxu0 0.0
    %1765 = vmatmul.mubr.f32.gmra.mrb[0].mxu0 %v1698
    %v1766 = vpop.f32.mrb[0].mxu0
    %v1767 = vadd.f32 %v1694, %v1766
    %v1768 = vpop.f32.mrb[0].mxu0
    %1769 = vdwg.mxu0
    %v1770 = vadd.f32 %v1767, %v559
    %v1771 = vxor.u32 %v1770, 2147483648
    %v1772 = vmul.f32 %v1771, 1.442695
    %v1773 = vpow.pop %v1772
    %v1774 = vadd.f32 %v1773, 1.0
    %v1775 = vrcp.pop %v1774
    %v1776 = vmul.f32 1.0, %v1775
    %v1777 = vtanh.pop %v1770
    %v1778 = vmul.f32 %v1776, %v1621
    %1780 = vrot.lane.b32.xlu0 %v1777, 64
    %v1781 = vpop.permute.xlu0 %1780
    %v1783 = vmul.f32 %v1776, %v1781
    %1785 = vrot.lane.b32.xlu0 %v1783, 96
    %v1786 = vpop.permute.xlu0 %1785
    %v1788 = vadd.f32 %v1778, %v1786
    %v1789 = vtanh.pop %v1788
    %1791 = vrot.lane.b32.xlu0 %v1789, 64
    %v1792 = vpop.permute.xlu0 %1791
    %v1794 = vmul.f32 %v1776, %v1792
    %v1795 = vld [vmem:[%s10] sm:$0xff]
    %v1796 = vld [vmem:[%s10 + $0x8] sm:$0xff]
    %v1797 = vld [vmem:[%s10 + $0x10] sm:$0xff]
    %v1798 = vld [vmem:[%s10 + $0x18] sm:$0xff]
    %v1799 = vld [vmem:[%s11] sm:$0x1]
    %v1801 = vlaneseq
    %v1802 = vshrl.u32 %v1801, 7
    %v1803 = vsub.s32 0, %v1802
    %v1804 = vrot.slane %v1799, %v1803
    %1807 = vrot.lane.b32.xlu0 %v1794, 64
    %v1808 = vpop.permute.xlu0 %1807
    %v1809 = vsel %vm333, %v1808, 0
    %1811 = vmatprep.subr.mxu0 0.0
    %1812 = vmatpush1.msra.mxu0 %v1795
    %1813 = vmatprep.subr.mxu0 0.0
    %1814 = vmatpush1.msra.mxu0 %v1796
    %1815 = vmatprep.subr.mxu0 0.0
    %1816 = vmatpush1.msra.mxu0 %v1797
    %1817 = vmatprep.subr.mxu0 0.0
    %1818 = vmatpush1.msra.mxu0 %v1798
    %1819 = vmatprep.subr.mxu0 0.0
    %1820 = vmatpush1.msra.mxu0 0.0
    %1821 = vmatprep.subr.mxu0 0.0
    %1822 = vmatpush1.msra.mxu0 0.0
    %1823 = vmatprep.subr.mxu0 0.0
    %1824 = vmatpush1.msra.mxu0 0.0
    %1825 = vmatprep.subr.mxu0 0.0
    %1826 = vmatpush1.msra.mxu0 0.0
    %1827 = vmatprep.subr.mxu0 0.0
    %1828 = vmatpush1.msra.mxu0 0.0
    %1829 = vmatprep.subr.mxu0 0.0
    %1830 = vmatpush1.msra.mxu0 0.0
    %1831 = vmatprep.subr.mxu0 0.0
    %1832 = vmatpush1.msra.mxu0 0.0
    %1833 = vmatprep.subr.mxu0 0.0
    %1834 = vmatpush1.msra.mxu0 0.0
    %1835 = vmatprep.subr.mxu0 0.0
    %1836 = vmatpush1.msra.mxu0 0.0
    %1837 = vmatprep.subr.mxu0 0.0
    %1838 = vmatpush1.msra.mxu0 0.0
    %1839 = vmatprep.subr.mxu0 0.0
    %1840 = vmatpush1.msra.mxu0 0.0
    %1841 = vmatprep.subr.mxu0 0.0
    %1842 = vmatpush1.msra.mxu0 0.0
    %1843 = vmatprep.subr.mxu0 0.0
    %1844 = vmatpush1.msra.mxu0 0.0
    %1845 = vmatprep.subr.mxu0 0.0
    %1846 = vmatpush1.msra.mxu0 0.0
    %1847 = vmatprep.subr.mxu0 0.0
    %1848 = vmatpush1.msra.mxu0 0.0
    %1849 = vmatprep.subr.mxu0 0.0
    %1850 = vmatpush1.msra.mxu0 0.0
    %1851 = vmatprep.subr.mxu0 0.0
    %1852 = vmatpush1.msra.mxu0 0.0
    %1853 = vmatprep.subr.mxu0 0.0
    %1854 = vmatpush1.msra.mxu0 0.0
    %1855 = vmatprep.subr.mxu0 0.0
    %1856 = vmatpush1.msra.mxu0 0.0
    %1857 = vmatprep.subr.mxu0 0.0
    %1858 = vmatpush1.msra.mxu0 0.0
    %1859 = vmatprep.subr.mxu0 0.0
    %1860 = vmatpush1.msra.mxu0 0.0
    %1861 = vmatprep.subr.mxu0 0.0
    %1862 = vmatpush1.msra.mxu0 0.0
    %1863 = vmatprep.subr.mxu0 0.0
    %1864 = vmatpush1.msra.mxu0 0.0
    %1865 = vmatprep.subr.mxu0 0.0
    %1866 = vmatpush1.msra.mxu0 0.0
    %1867 = vmatprep.subr.mxu0 0.0
    %1868 = vmatpush1.msra.mxu0 0.0
    %1869 = vmatprep.subr.mxu0 0.0
    %1870 = vmatpush1.msra.mxu0 0.0
    %1871 = vmatprep.subr.mxu0 0.0
    %1872 = vmatpush1.msra.mxu0 0.0
    %1873 = vmatprep.subr.mxu0 0.0
    %1874 = vmatpush1.msra.mxu0 0.0
    %1875 = vmatprep.mubr.f32.mxu0 0.0
    %1876 = vmatmul.mubr.f32.gmra.mrb[0].mxu0 %v1809
    %v1877 = vpop.f32.mrb[0].mxu0
    %v1878 = vadd.f32 %v1804, %v1877
    %v1879 = vpop.f32.mrb[0].mxu0
    %1880 = vdwg.mxu0
    %v1881 = vmax.f32 %v1878, 0.0
    %v1882 = vld [vmem:[#allocation15] sm:$0xff]
    %v1883 = vld [vmem:[#allocation15 + $0x8] sm:$0xff]
    %v1884 = vld [vmem:[%s13] sm:$0x1]
    %v1886 = vlaneseq
    %v1887 = vshrl.u32 %v1886, 7
    %v1888 = vsub.s32 0, %v1887
    %v1889 = vrot.slane %v1884, %v1888
    %v1892 = vsel %vm176, %v1881, 0
    %1894 = vmatprep.subr.mxu0 0.0
    %1895 = vmatpush1.msra.mxu0 %v1882
    %1896 = vmatprep.subr.mxu0 0.0
    %1897 = vmatpush1.msra.mxu0 %v1883
    %1898 = vmatprep.subr.mxu0 0.0
    %1899 = vmatpush1.msra.mxu0 0.0
    %1900 = vmatprep.subr.mxu0 0.0
    %1901 = vmatpush1.msra.mxu0 0.0
    %1902 = vmatprep.subr.mxu0 0.0
    %1903 = vmatpush1.msra.mxu0 0.0
    %1904 = vmatprep.subr.mxu0 0.0
    %1905 = vmatpush1.msra.mxu0 0.0
    %1906 = vmatprep.subr.mxu0 0.0
    %1907 = vmatpush1.msra.mxu0 0.0
    %1908 = vmatprep.subr.mxu0 0.0
    %1909 = vmatpush1.msra.mxu0 0.0
    %1910 = vmatprep.subr.mxu0 0.0
    %1911 = vmatpush1.msra.mxu0 0.0
    %1912 = vmatprep.subr.mxu0 0.0
    %1913 = vmatpush1.msra.mxu0 0.0
    %1914 = vmatprep.subr.mxu0 0.0
    %1915 = vmatpush1.msra.mxu0 0.0
    %1916 = vmatprep.subr.mxu0 0.0
    %1917 = vmatpush1.msra.mxu0 0.0
    %1918 = vmatprep.subr.mxu0 0.0
    %1919 = vmatpush1.msra.mxu0 0.0
    %1920 = vmatprep.subr.mxu0 0.0
    %1921 = vmatpush1.msra.mxu0 0.0
    %1922 = vmatprep.subr.mxu0 0.0
    %1923 = vmatpush1.msra.mxu0 0.0
    %1924 = vmatprep.subr.mxu0 0.0
    %1925 = vmatpush1.msra.mxu0 0.0
    %1926 = vmatprep.subr.mxu0 0.0
    %1927 = vmatpush1.msra.mxu0 0.0
    %1928 = vmatprep.subr.mxu0 0.0
    %1929 = vmatpush1.msra.mxu0 0.0
    %1930 = vmatprep.subr.mxu0 0.0
    %1931 = vmatpush1.msra.mxu0 0.0
    %1932 = vmatprep.subr.mxu0 0.0
    %1933 = vmatpush1.msra.mxu0 0.0
    %1934 = vmatprep.subr.mxu0 0.0
    %1935 = vmatpush1.msra.mxu0 0.0
    %1936 = vmatprep.subr.mxu0 0.0
    %1937 = vmatpush1.msra.mxu0 0.0
    %1938 = vmatprep.subr.mxu0 0.0
    %1939 = vmatpush1.msra.mxu0 0.0
    %1940 = vmatprep.subr.mxu0 0.0
    %1941 = vmatpush1.msra.mxu0 0.0
    %1942 = vmatprep.subr.mxu0 0.0
    %1943 = vmatpush1.msra.mxu0 0.0
    %1944 = vmatprep.subr.mxu0 0.0
    %1945 = vmatpush1.msra.mxu0 0.0
    %1946 = vmatprep.subr.mxu0 0.0
    %1947 = vmatpush1.msra.mxu0 0.0
    %1948 = vmatprep.subr.mxu0 0.0
    %1949 = vmatpush1.msra.mxu0 0.0
    %1950 = vmatprep.subr.mxu0 0.0
    %1951 = vmatpush1.msra.mxu0 0.0
    %1952 = vmatprep.subr.mxu0 0.0
    %1953 = vmatpush1.msra.mxu0 0.0
    %1954 = vmatprep.subr.mxu0 0.0
    %1955 = vmatpush1.msra.mxu0 0.0
    %1956 = vmatprep.subr.mxu0 0.0
    %1957 = vmatpush1.msra.mxu0 0.0
    %1958 = vmatprep.mubr.f32.mxu0 0.0
    %1959 = vmatmul.mubr.f32.gmra.mrb[0].mxu0 %v1892
    %v1960 = vpop.f32.mrb[0].mxu0
    %v1961 = vadd.f32 %v1889, %v1960
    %v1962 = vpop.f32.mrb[0].mxu0
    %1963 = vdwg.mxu0
    %1964 = vst [vmem:[#allocation16] sm:$0xff] %v1961
    // Predicated region
    $region90: #{tpu_custom_call.1} parent=1 // pred_check
      _
    $region91: #{tpu_custom_call.1} parent=1 // pred_check_branch
      %1966 = sbr.rel (0) target = $region93
    $region92: #{tpu_custom_call.1} parent=1 // pred_region
      %s1968 = ssub.s32 128, 128
      %1969 = vsyncadd [#allocation4], %s1968
      %s1971 = sshll.u32 [#allocation16], 4
      %s1972 = int_to_ptr.vmem [resolvable:$true] %s1971
      %1974 = dma.vmem_to_hbm [thread:$0]  %s1972, 128, %s14, [#allocation4]
    $region93: #{tpu_custom_call.1} parent=1 // pred_fallthru
      _
    // Predicated region
    $region94: #{tpu_custom_call.1} parent=1 // pred_check
      _
    $region95: #{tpu_custom_call.1} parent=1 // pred_check_branch
      %1976 = sbr.rel (0) target = $region97
    $region96: #{tpu_custom_call.1} parent=1 // pred_region
      %1977 = dma.done [#allocation4], 128
    $region97: #{tpu_custom_call.1} parent=1 // pred_fallthru
      _
    %1978 = vsyncpa [#allocation3], 1
    %1979 = vsyncpa [#allocation8], 1
    %1980 = vsyncpa [#allocation11], 1
    %1981 = vsyncpa [#allocation14], 1
    %1982 = vsyncpa [#allocation4], 1
    %1983 = vsyncpa [#allocation5], 1

</llo_original>
